<compile_context>
chip_gen: v7x
topology: tpu7x:2x2x1
jax: 0.10.0
libtpu: 0.0.40
codegen_flags: <defaults>
</compile_context>

<pallas_src>
import jax
import jax.numpy as jnp
from jax import lax
from jax.experimental import pallas as pl
from jax.experimental.pallas import tpu as pltpu

ALPHA = 0.2    # LeakyReLU slope used by self.relu (module-level `alpha` global)
LRELU = 0.01   # default nn.LeakyReLU slope inside fedge / fnode
# TODO(synk): dropout / att_drop / feat_drop are module-level globals in the source;
#             they are treated as eval-mode identity here (no RNG in the kernel).


def _make_d2gcn_kernel(compute_dtype):
    cdt = compute_dtype

    def kernel(bias_ref,                  # SMEM (4,): b1e0, b1e1, b1n0, b1n1
               sproj_ref,                 # VMEM [8, SC]: rows a1, ue0, ue1, un0, un1 (src chunk)
               a2_ref, ve0_ref, ve1_ref,  # VMEM [BJ, 1] hoisted dst-side terms
               hd_ref,                    # VMEM [BJ, D] dst features (residual only)
               w2e_ref, b2e_ref,          # [2, D], [1, D] fedge layer-2 (compute dtype)
               w1ne_ref,                  # [2, D] fnode layer-1, edge-feature half (transposed)
               w2n_ref, b2n_ref,          # [2, D], [1, D] fnode layer-2 (compute dtype)
               out_ref,                   # [BJ, D] f32
               m_ref, l_ref, acc_ref):    # online-softmax scratch (f32)
        SC = sproj_ref.shape[1]
        BJ, D = out_ref.shape
        b = pl.program_id(0)              # dst block index
        c = pl.program_id(1)              # source chunk index

        @pl.when(c == 0)
        def _init():
            m_ref[...] = jnp.full_like(m_ref, -1e30)
            l_ref[...] = jnp.zeros_like(l_ref)
            acc_ref[...] = jnp.zeros_like(acc_ref)

        # ---- attention logits for this (dst block, src chunk) -------------------
        a1 = sproj_ref[0:1, :]                               # [1, SC]
        e = a1 + a2_ref[...]                                 # [BJ, SC]
        e = jnp.maximum(e, ALPHA * e)                        # LeakyReLU(alpha)
        src_i = lax.broadcasted_iota(jnp.int32, (BJ, SC), 1) + c * SC
        dst_j = lax.broadcasted_iota(jnp.int32, (BJ, SC), 0) + b * BJ
        valid = src_i != dst_j                               # no self edges
        e = jnp.where(valid, e, -1e30)

        # ---- online-softmax update (f32) -----------------------------------------
        m_prev = m_ref[...]
        m_new = jnp.maximum(m_prev, jnp.max(e, axis=-1, keepdims=True))
        corr = jnp.exp(m_prev - m_new)                       # [BJ, 1]
        p = jnp.where(valid, jnp.exp(e - m_new), 0.0)        # [BJ, SC] unnormalized att
        l_ref[...] = corr * l_ref[...] + jnp.sum(p, axis=-1, keepdims=True)
        m_ref[...] = m_new

        # ---- fedge: layer 1 = broadcast adds of hoisted terms (hidden width 2) ---
        z0 = sproj_ref[1:2, :] + ve0_ref[...] + bias_ref[0]  # [BJ, SC]
        z1 = sproj_ref[2:3, :] + ve1_ref[...] + bias_ref[1]
        z0 = jnp.maximum(z0, LRELU * z0).astype(cdt)
        z1 = jnp.maximum(z1, LRELU * z1).astype(cdt)
        #        layer 2 as VPU outer products (compute dtype)
        ef = jnp.maximum(z0[:, :, None] * w2e_ref[0:1, :]
                         + z1[:, :, None] * w2e_ref[1:2, :]
                         + b2e_ref[...], 0.0)                # [BJ, SC, D]

        # ---- fnode: layer 1 = hoisted src half + lane reduce of ef (f32 accum) ---
        me0 = jnp.sum((ef * w1ne_ref[0:1, :]).astype(jnp.float32), axis=-1)  # [BJ, SC]
        me1 = jnp.sum((ef * w1ne_ref[1:2, :]).astype(jnp.float32), axis=-1)
        m0 = sproj_ref[3:4, :] + me0 + bias_ref[2]
        m1 = sproj_ref[4:5, :] + me1 + bias_ref[3]
        m0 = jnp.maximum(m0, LRELU * m0).astype(cdt)
        m1 = jnp.maximum(m1, LRELU * m1).astype(cdt)
        #        layer 2 as VPU outer products
        msg = jnp.maximum(m0[:, :, None] * w2n_ref[0:1, :]
                          + m1[:, :, None] * w2n_ref[1:2, :]
                          + b2n_ref[...], 0.0)               # [BJ, SC, D]

        # ---- attention-weighted accumulation (f32), rescaled for new max ---------
        acc_ref[...] = corr * acc_ref[...] + jnp.sum(p[:, :, None] * msg, axis=1)

        @pl.when(c == pl.num_programs(1) - 1)
        def _finalize():
            out_ref[...] = (acc_ref[...] * pl.reciprocal(l_ref[...], approx=True)
                            + hd_ref[...]).astype(out_ref.dtype)

    return kernel


def _auto_compute_dtype():
    """bf16 for the edge-sized elementwise chains only on chips with a bf16 VPU."""
    try:
        kind = jax.devices()[0].device_kind.lower()
    except Exception:
        return jnp.float32
    return jnp.bfloat16 if ("v6" in kind or "v7" in kind) else jnp.float32


def d2gcn_forward(n_feature, params, *, block_j=None, src_chunk=None,
                  compute_dtype=None):
    N, D = n_feature.shape
    if compute_dtype is None:
        compute_dtype = _auto_compute_dtype()
    if src_chunk is None:                      # decouple VMEM from N
        src_chunk = N
        for cand in (512, 256, 128):
            if N > cand and N % cand == 0:
                src_chunk = cand
                break
    if block_j is None:                        # bigger dst tiles, but keep grid >= 2
        block_j = 8
        cap = max(8, min(64, N // 2))
        for cand in range((cap // 8) * 8, 7, -8):
            if N % cand == 0:
                block_j = cand
                break

    assert N > 1 and D % 128 == 0
    assert N % block_j == 0 and block_j % 8 == 0
    assert N % src_chunk == 0 and (src_chunk == N or src_chunk % 128 == 0)
    w1e, w1n = params["w1e"], params["w1n"]
    assert w1e.shape == (2 * D, 2) and w1n.shape == (2 * D, 2), \
        "kernel assumes hidden width in_dim//64 == out_dim//64 == 2"

    # ---- hoisted per-node projections: one [N,D]x[D,8] matmul in the wrapper ----
    # source-side slab, lane-dense [8, N]: rows = a1, ue0, ue1, un0, un1, pad
    w_src = jnp.concatenate(
        [params["attn_l"].reshape(D, 1), w1e[:D, :], w1n[:D, :],
         jnp.zeros((D, 3), jnp.float32)], axis=1)                       # [D, 8]
    sproj = jnp.transpose(n_feature @ w_src)                            # [8, N]
    # destination-side terms, sliced per dst block: a2, ve0, ve1
    w_dst = jnp.concatenate([params["attn_r"].reshape(D, 1), w1e[D:, :]], axis=1)
    dproj = n_feature @ w_dst                                           # [N, 3]
    a2_col, ve0_col, ve1_col = dproj[:, 0:1], dproj[:, 1:2], dproj[:, 2:3]

    # second-layer / edge-feature weights: layout plumbing + compute-dtype cast
    cdt = compute_dtype
    w1ne_t = jnp.transpose(w1n[D:, :]).astype(cdt)                      # [2, D]
    w2e = params["w2e"].astype(cdt)
    b2e = params["b2e"].astype(cdt)
    w2n = params["w2n"].astype(cdt)
    b2n = params["b2n"].astype(cdt)
    bias_sc = jnp.concatenate([params["b1e"].reshape(-1),
                               params["b1n"].reshape(-1)]).astype(jnp.float32)  # (4,)

    # ---- explicit VMEM budget: edge temporaries dominate; cap below physical ----
    cb = jnp.dtype(cdt).itemsize
    edge_bytes = 4 * block_j * src_chunk * D * max(cb, 4)      # ef/msg + f32 partials
    stream_bytes = 2 * 4 * (8 * src_chunk + 3 * block_j + 2 * block_j * D)
    fixed_bytes = 4 * (10 * D + block_j * D + 2 * block_j) + (2 << 20)
    needed = edge_bytes + stream_bytes + fixed_bytes
    try:
        phys = int(pltpu.get_tpu_info().vmem_capacity_bytes)
    except Exception:
        phys = 64 << 20                                        # v7x physical; safe floor
    vmem_limit = int(min(max(needed, 32 << 20), int(phys * 0.85)))

    const = lambda a: pl.BlockSpec(a.shape, lambda b, c: (0,) * a.ndim)
    grid = (N // block_j, N // src_chunk)

    return pl.pallas_call(
        _make_d2gcn_kernel(cdt),
        out_shape=jax.ShapeDtypeStruct((N, D), jnp.float32),
        grid=grid,
        in_specs=[
            pl.BlockSpec(memory_space=pltpu.MemorySpace.SMEM),        # hidden-layer biases
            pl.BlockSpec((8, src_chunk), lambda b, c: (0, c)),        # src-proj chunk [8, SC]
            pl.BlockSpec((block_j, 1), lambda b, c: (b, 0)),          # a2 (dst)
            pl.BlockSpec((block_j, 1), lambda b, c: (b, 0)),          # ve0 (dst)
            pl.BlockSpec((block_j, 1), lambda b, c: (b, 0)),          # ve1 (dst)
            pl.BlockSpec((block_j, D), lambda b, c: (b, 0)),          # h dst block (residual)
            const(w2e), const(b2e), const(w1ne_t), const(w2n), const(b2n),
        ],
        out_specs=pl.BlockSpec((block_j, D), lambda b, c: (b, 0)),
        scratch_shapes=[pltpu.VMEM((block_j, 1), jnp.float32),        # running max
                        pltpu.VMEM((block_j, 1), jnp.float32),        # running denom
                        pltpu.VMEM((block_j, D), jnp.float32)],       # f32 accumulator
        compiler_params=pltpu.CompilerParams(
            dimension_semantics=("parallel", "arbitrary"),
            vmem_limit_bytes=vmem_limit),
    )(bias_sc, sproj, a2_col, ve0_col, ve1_col, n_feature,
      w2e, b2e, w1ne_t, w2n, b2n)


def init_params(key, in_dim, out_dim):
    """Deterministic synthetic parameters matching D2GCN.__init__ shapes."""
    h1, h2 = in_dim // 64, out_dim // 64
    ks = jax.random.split(key, 10)

    def lin(kw, kb, fan_in, fan_out):
        w = jax.random.normal(kw, (fan_in, fan_out), jnp.float32) / jnp.sqrt(fan_in)
        b = jax.random.uniform(kb, (1, fan_out), jnp.float32,
                               -1.0 / jnp.sqrt(fan_in), 1.0 / jnp.sqrt(fan_in))
        return w, b

    w1e, b1e = lin(ks[0], ks[1], 2 * in_dim, h1)
    w2e, b2e = lin(ks[2], ks[3], h1, out_dim)
    w1n, b1n = lin(ks[4], ks[5], in_dim + out_dim, h2)
    w2n, b2n = lin(ks[6], ks[7], h2, out_dim)

    # Fold eval-mode BatchNorm1d (gamma=1, beta=0, mean=0, var=1, eps=1e-5)
    # into the preceding Linear: exact affine fold.
    s = jnp.float32(1.0 / jnp.sqrt(1.0 + 1e-5))
    w1e, b1e, w2e, b2e = w1e * s, b1e * s, w2e * s, b2e * s
    w1n, b1n, w2n, b2n = w1n * s, b1n * s, w2n * s, b2n * s

    # attn_l / attn_r : xavier_normal_, gain=1.414, shape (1, out_dim)
    std = 1.414 * jnp.sqrt(2.0 / (1.0 + out_dim))
    attn_l = jax.random.normal(ks[8], (1, out_dim), jnp.float32) * std
    attn_r = jax.random.normal(ks[9], (1, out_dim), jnp.float32) * std

    return dict(attn_l=attn_l, attn_r=attn_r,
                w1e=w1e, b1e=b1e, w2e=w2e, b2e=b2e,
                w1n=w1n, b1n=b1n, w2n=w2n, b2n=b2n)


def d2gcn_ref(h, p):
    """Pure-JAX dense reference of the same forward pass (for verification)."""
    N, D = h.shape
    a1 = jnp.sum(h * p["attn_l"], axis=-1)          # [N]  (per source)
    a2 = jnp.sum(h * p["attn_r"], axis=-1)          # [N]  (per destination)
    e = a1[None, :] + a2[:, None]                   # e[dst j, src i]
    e = jnp.where(e > 0, e, ALPHA * e)
    valid = ~jnp.eye(N, dtype=bool)
    e = jnp.where(valid, e, -1e30)
    att = jax.nn.softmax(e, axis=1)
    att = jnp.where(valid, att, 0.0)

    hs = jnp.broadcast_to(h[None, :, :], (N, N, D))   # src feats per (j, i)
    hd = jnp.broadcast_to(h[:, None, :], (N, N, D))   # dst feats per (j, i)
    z = jnp.concatenate([hs, hd], -1) @ p["w1e"] + p["b1e"]
    z = jnp.where(z > 0, z, LRELU * z)
    ef = jnp.maximum(z @ p["w2e"] + p["b2e"], 0.0)
    m = jnp.concatenate([hs, ef], -1) @ p["w1n"] + p["b1n"]
    m = jnp.where(m > 0, m, LRELU * m)
    msg = jnp.maximum(m @ p["w2n"] + p["b2n"], 0.0)
    return jnp.sum(att[..., None] * msg, axis=1) + h


if __name__ == "__main__":
    # in_feat_dim = out_feat_dim = 128 (so in_feat_dim // 64 = 2 and the residual
    # `sum(m) + h` is shape-consistent); N = 16 graph nodes.
    N, D = 16, 128
    key = jax.random.PRNGKey(0)
    k_param, k_x = jax.random.split(key)
    params = init_params(k_param, D, D)
    x = jax.random.normal(k_x, (N, D), jnp.float32)

    cdt = _auto_compute_dtype()
    out = d2gcn_forward(x, params, block_j=8, src_chunk=16, compute_dtype=cdt)
    out = jax.block_until_ready(out)

    ref = jax.block_until_ready(d2gcn_ref(x, params))
    assert out.shape == (N, D) and out.dtype == jnp.float32
    tol = 1e-2 if jnp.dtype(cdt) == jnp.dtype(jnp.float32) else 5e-2
    err = float(jnp.max(jnp.abs(out - ref)))
    assert jnp.allclose(out, ref, atol=tol, rtol=tol), err
    print("KERNEL_OK")
</pallas_src>

<mosaic_0001>
module attributes {stable_mosaic.version = 11 : i64} {
  func.func @kernel(%arg0: i32, %arg1: i32, %arg2: memref<4xf32, #tpu.memory_space<smem>>, %arg3: memref<8x16xf32, #tpu.memory_space<vmem>>, %arg4: memref<8x1xf32, #tpu.memory_space<vmem>>, %arg5: memref<8x1xf32, #tpu.memory_space<vmem>>, %arg6: memref<8x1xf32, #tpu.memory_space<vmem>>, %arg7: memref<8x128xf32, #tpu.memory_space<vmem>>, %arg8: memref<2x128xf32, #tpu.memory_space<vmem>>, %arg9: memref<1x128xf32, #tpu.memory_space<vmem>>, %arg10: memref<2x128xf32, #tpu.memory_space<vmem>>, %arg11: memref<2x128xf32, #tpu.memory_space<vmem>>, %arg12: memref<1x128xf32, #tpu.memory_space<vmem>>, %arg13: memref<8x128xf32, #tpu.memory_space<vmem>>, %arg14: memref<8x1xf32, #tpu.memory_space<vmem>>, %arg15: memref<8x1xf32, #tpu.memory_space<vmem>>, %arg16: memref<8x128xf32, #tpu.memory_space<vmem>>) attributes {dimension_semantics = [#tpu.dimension_semantics<parallel>, #tpu.dimension_semantics<arbitrary>], iteration_bounds = array<i64: 2, 1>, scalar_prefetch = 0 : i64, scratch_operands = 3 : i64, tpu.core_type = #tpu.core_type<tc>, window_params = [{transform_indices = @transform_0, window_bounds = array<i64: 4>}, {transform_indices = @transform_1, window_bounds = array<i64: 8, 16>}, {transform_indices = @transform_2, window_bounds = array<i64: 8, 1>}, {transform_indices = @transform_3, window_bounds = array<i64: 8, 1>}, {transform_indices = @transform_4, window_bounds = array<i64: 8, 1>}, {transform_indices = @transform_5, window_bounds = array<i64: 8, 128>}, {pipeline_mode = #tpu.pipeline_mode<synchronous>, transform_indices = @transform_6, window_bounds = array<i64: 2, 128>}, {pipeline_mode = #tpu.pipeline_mode<synchronous>, transform_indices = @transform_7, window_bounds = array<i64: 1, 128>}, {pipeline_mode = #tpu.pipeline_mode<synchronous>, transform_indices = @transform_8, window_bounds = array<i64: 2, 128>}, {pipeline_mode = #tpu.pipeline_mode<synchronous>, transform_indices = @transform_9, window_bounds = array<i64: 2, 128>}, {pipeline_mode = #tpu.pipeline_mode<synchronous>, transform_indices = @transform_10, window_bounds = array<i64: 1, 128>}, {transform_indices = @transform_11, window_bounds = array<i64: 8, 128>}]} {
    %c0_i32 = arith.constant 0 : i32
    %0 = arith.cmpi eq, %arg1, %c0_i32 : i32
    %1 = arith.extui %0 : i1 to i32
    %c0_i32_0 = arith.constant 0 : i32
    %2 = arith.cmpi ne, %1, %c0_i32_0 : i32
    scf.if %2 {
      %cst_59 = arith.constant -1.000000e+30 : f32
      %140 = vector.broadcast %cst_59 : f32 to vector<8x1xf32>
      %c0_60 = arith.constant 0 : index
      %c0_61 = arith.constant 0 : index
      %141 = vector.load %arg14[%c0_60, %c0_61] : memref<8x1xf32, #tpu.memory_space<vmem>>, vector<8x1xf32>
      tpu.vector_store %arg14[%c0_60, %c0_61], %140 {strides = array<i32>} : memref<8x1xf32, #tpu.memory_space<vmem>>, vector<8x1xf32>,
      %cst_62 = arith.constant 0.000000e+00 : f32
      %142 = vector.broadcast %cst_62 : f32 to vector<8x1xf32>
      %c0_63 = arith.constant 0 : index
      %c0_64 = arith.constant 0 : index
      %143 = vector.load %arg15[%c0_63, %c0_64] : memref<8x1xf32, #tpu.memory_space<vmem>>, vector<8x1xf32>
      tpu.vector_store %arg15[%c0_63, %c0_64], %142 {strides = array<i32>} : memref<8x1xf32, #tpu.memory_space<vmem>>, vector<8x1xf32>,
      %cst_65 = arith.constant 0.000000e+00 : f32
      %144 = vector.broadcast %cst_65 : f32 to vector<8x128xf32>
      %c0_66 = arith.constant 0 : index
      %c0_67 = arith.constant 0 : index
      %145 = vector.load %arg16[%c0_66, %c0_67] : memref<8x128xf32, #tpu.memory_space<vmem>>, vector<8x128xf32>
      tpu.vector_store %arg16[%c0_66, %c0_67], %144 {strides = array<i32>} : memref<8x128xf32, #tpu.memory_space<vmem>>, vector<8x128xf32>,
    } else {
    }
    %c0 = arith.constant 0 : index
    %c0_1 = arith.constant 0 : index
    %3 = vector.load %arg3[%c0, %c0_1] : memref<8x16xf32, #tpu.memory_space<vmem>>, vector<1x16xf32>
    %c0_2 = arith.constant 0 : index
    %c0_3 = arith.constant 0 : index
    %4 = vector.load %arg4[%c0_2, %c0_3] : memref<8x1xf32, #tpu.memory_space<vmem>>, vector<8x1xf32>
    %5 = vector.broadcast %3 : vector<1x16xf32> to vector<8x16xf32>
    %6 = vector.broadcast %4 : vector<8x1xf32> to vector<8x16xf32>
    %7 = arith.addf %5, %6 : vector<8x16xf32>
    %cst = arith.constant 2.000000e-01 : f32
    %8 = vector.broadcast %cst : f32 to vector<8x16xf32>
    %9 = arith.mulf %8, %7 : vector<8x16xf32>
    %10 = arith.maximumf %7, %9 : vector<8x16xf32>
    %11 = tpu.iota {dimensions = array<i32: 1>} : vector<8x16xi32>
    %c16_i32 = arith.constant 16 : i32
    %12 = arith.muli %arg1, %c16_i32 : i32
    %13 = vector.broadcast %12 : i32 to vector<8x16xi32>
    %14 = arith.addi %11, %13 : vector<8x16xi32>
    %15 = tpu.iota {dimensions = array<i32: 0>} : vector<8x16xi32>
    %c8_i32 = arith.constant 8 : i32
    %16 = arith.muli %arg0, %c8_i32 : i32
    %17 = vector.broadcast %16 : i32 to vector<8x16xi32>
    %18 = arith.addi %15, %17 : vector<8x16xi32>
    %19 = arith.cmpi ne, %14, %18 : vector<8x16xi32>
    %cst_4 = arith.constant -1.000000e+30 : f32
    %20 = vector.broadcast %cst_4 : f32 to vector<8x16xf32>
    %21 = arith.select %19, %10, %20 : vector<8x16xi1>, vector<8x16xf32>
    %c0_5 = arith.constant 0 : index
    %c0_6 = arith.constant 0 : index
    %22 = vector.load %arg14[%c0_5, %c0_6] : memref<8x1xf32, #tpu.memory_space<vmem>>, vector<8x1xf32>
    %cst_7 = arith.constant dense<0xFF800000> : vector<8xf32>
    %23 = vector.multi_reduction <maximumf>, %21, %cst_7 [1] : vector<8x16xf32> to vector<8xf32>
    %24 = vector.shape_cast %23 : vector<8xf32> to vector<8x1xf32>
    %25 = arith.maximumf %22, %24 : vector<8x1xf32>
    %26 = arith.subf %22, %25 : vector<8x1xf32>
    %27 = math.exp %26 : vector<8x1xf32>
    %28 = vector.broadcast %25 : vector<8x1xf32> to vector<8x16xf32>
    %29 = arith.subf %21, %28 : vector<8x16xf32>
    %30 = math.exp %29 : vector<8x16xf32>
    %cst_8 = arith.constant 0.000000e+00 : f32
    %31 = vector.broadcast %cst_8 : f32 to vector<8x16xf32>
    %32 = arith.select %19, %30, %31 : vector<8x16xi1>, vector<8x16xf32>
    %c0_9 = arith.constant 0 : index
    %c0_10 = arith.constant 0 : index
    %33 = vector.load %arg15[%c0_9, %c0_10] : memref<8x1xf32, #tpu.memory_space<vmem>>, vector<8x1xf32>
    %34 = arith.mulf %27, %33 : vector<8x1xf32>
    %cst_11 = arith.constant dense<0.000000e+00> : vector<8xf32>
    %35 = vector.multi_reduction <add>, %32, %cst_11 [1] : vector<8x16xf32> to vector<8xf32>
    %36 = vector.shape_cast %35 : vector<8xf32> to vector<8x1xf32>
    %37 = arith.addf %34, %36 : vector<8x1xf32>
    %c0_12 = arith.constant 0 : index
    %c0_13 = arith.constant 0 : index
    %38 = vector.load %arg15[%c0_12, %c0_13] : memref<8x1xf32, #tpu.memory_space<vmem>>, vector<8x1xf32>
    tpu.vector_store %arg15[%c0_12, %c0_13], %37 {strides = array<i32>} : memref<8x1xf32, #tpu.memory_space<vmem>>, vector<8x1xf32>,
    %c0_14 = arith.constant 0 : index
    %c0_15 = arith.constant 0 : index
    %39 = vector.load %arg14[%c0_14, %c0_15] : memref<8x1xf32, #tpu.memory_space<vmem>>, vector<8x1xf32>
    tpu.vector_store %arg14[%c0_14, %c0_15], %25 {strides = array<i32>} : memref<8x1xf32, #tpu.memory_space<vmem>>, vector<8x1xf32>,
    %c1 = arith.constant 1 : index
    %c0_16 = arith.constant 0 : index
    %40 = vector.load %arg3[%c1, %c0_16] : memref<8x16xf32, #tpu.memory_space<vmem>>, vector<1x16xf32>
    %c0_17 = arith.constant 0 : index
    %c0_18 = arith.constant 0 : index
    %41 = vector.load %arg5[%c0_17, %c0_18] : memref<8x1xf32, #tpu.memory_space<vmem>>, vector<8x1xf32>
    %42 = vector.broadcast %40 : vector<1x16xf32> to vector<8x16xf32>
    %43 = vector.broadcast %41 : vector<8x1xf32> to vector<8x16xf32>
    %44 = arith.addf %42, %43 : vector<8x16xf32>
    %c0_19 = arith.constant 0 : index
    %45 = memref.load %arg2[%c0_19] : memref<4xf32, #tpu.memory_space<smem>>
    %46 = vector.broadcast %45 : f32 to vector<8x16xf32>
    %47 = arith.addf %44, %46 : vector<8x16xf32>
    %c2 = arith.constant 2 : index
    %c0_20 = arith.constant 0 : index
    %48 = vector.load %arg3[%c2, %c0_20] : memref<8x16xf32, #tpu.memory_space<vmem>>, vector<1x16xf32>
    %c0_21 = arith.constant 0 : index
    %c0_22 = arith.constant 0 : index
    %49 = vector.load %arg6[%c0_21, %c0_22] : memref<8x1xf32, #tpu.memory_space<vmem>>, vector<8x1xf32>
    %50 = vector.broadcast %48 : vector<1x16xf32> to vector<8x16xf32>
    %51 = vector.broadcast %49 : vector<8x1xf32> to vector<8x16xf32>
    %52 = arith.addf %50, %51 : vector<8x16xf32>
    %c1_23 = arith.constant 1 : index
    %53 = memref.load %arg2[%c1_23] : memref<4xf32, #tpu.memory_space<smem>>
    %54 = vector.broadcast %53 : f32 to vector<8x16xf32>
    %55 = arith.addf %52, %54 : vector<8x16xf32>
    %cst_24 = arith.constant 0.00999999977 : f32
    %56 = vector.broadcast %cst_24 : f32 to vector<8x16xf32>
    %57 = arith.mulf %56, %47 : vector<8x16xf32>
    %58 = arith.maximumf %47, %57 : vector<8x16xf32>
    %cst_25 = arith.constant 0.00999999977 : f32
    %59 = vector.broadcast %cst_25 : f32 to vector<8x16xf32>
    %60 = arith.mulf %59, %55 : vector<8x16xf32>
    %61 = arith.maximumf %55, %60 : vector<8x16xf32>
    %62 = vector.shape_cast %58 : vector<8x16xf32> to vector<8x16x1xf32>
    %c0_26 = arith.constant 0 : index
    %c0_27 = arith.constant 0 : index
    %63 = vector.load %arg8[%c0_26, %c0_27] : memref<2x128xf32, #tpu.memory_space<vmem>>, vector<1x128xf32>
    %64 = vector.shape_cast %63 : vector<1x128xf32> to vector<1x1x128xf32>
    %65 = vector.broadcast %62 : vector<8x16x1xf32> to vector<8x16x128xf32>
    %66 = vector.broadcast %64 : vector<1x1x128xf32> to vector<8x16x128xf32>
    %67 = arith.mulf %65, %66 : vector<8x16x128xf32>
    %68 = vector.shape_cast %61 : vector<8x16xf32> to vector<8x16x1xf32>
    %c1_28 = arith.constant 1 : index
    %c0_29 = arith.constant 0 : index
    %69 = vector.load %arg8[%c1_28, %c0_29] : memref<2x128xf32, #tpu.memory_space<vmem>>, vector<1x128xf32>
    %70 = vector.shape_cast %69 : vector<1x128xf32> to vector<1x1x128xf32>
    %71 = vector.broadcast %68 : vector<8x16x1xf32> to vector<8x16x128xf32>
    %72 = vector.broadcast %70 : vector<1x1x128xf32> to vector<8x16x128xf32>
    %73 = arith.mulf %71, %72 : vector<8x16x128xf32>
    %74 = arith.addf %67, %73 : vector<8x16x128xf32>
    %c0_30 = arith.constant 0 : index
    %c0_31 = arith.constant 0 : index
    %75 = vector.load %arg9[%c0_30, %c0_31] : memref<1x128xf32, #tpu.memory_space<vmem>>, vector<1x128xf32>
    %76 = vector.shape_cast %75 : vector<1x128xf32> to vector<1x1x128xf32>
    %77 = vector.broadcast %76 : vector<1x1x128xf32> to vector<8x16x128xf32>
    %78 = arith.addf %74, %77 : vector<8x16x128xf32>
    %cst_32 = arith.constant 0.000000e+00 : f32
    %79 = vector.broadcast %cst_32 : f32 to vector<8x16x128xf32>
    %80 = arith.maximumf %78, %79 : vector<8x16x128xf32>
    %c0_33 = arith.constant 0 : index
    %c0_34 = arith.constant 0 : index
    %81 = vector.load %arg10[%c0_33, %c0_34] : memref<2x128xf32, #tpu.memory_space<vmem>>, vector<1x128xf32>
    %82 = vector.shape_cast %81 : vector<1x128xf32> to vector<1x1x128xf32>
    %83 = vector.broadcast %82 : vector<1x1x128xf32> to vector<8x16x128xf32>
    %84 = arith.mulf %80, %83 : vector<8x16x128xf32>
    %cst_35 = arith.constant dense<0.000000e+00> : vector<8x16xf32>
    %85 = vector.multi_reduction <add>, %84, %cst_35 [2] : vector<8x16x128xf32> to vector<8x16xf32>
    %c1_36 = arith.constant 1 : index
    %c0_37 = arith.constant 0 : index
    %86 = vector.load %arg10[%c1_36, %c0_37] : memref<2x128xf32, #tpu.memory_space<vmem>>, vector<1x128xf32>
    %87 = vector.shape_cast %86 : vector<1x128xf32> to vector<1x1x128xf32>
    %88 = vector.broadcast %87 : vector<1x1x128xf32> to vector<8x16x128xf32>
    %89 = arith.mulf %80, %88 : vector<8x16x128xf32>
    %cst_38 = arith.constant dense<0.000000e+00> : vector<8x16xf32>
    %90 = vector.multi_reduction <add>, %89, %cst_38 [2] : vector<8x16x128xf32> to vector<8x16xf32>
    %c3 = arith.constant 3 : index
    %c0_39 = arith.constant 0 : index
    %91 = vector.load %arg3[%c3, %c0_39] : memref<8x16xf32, #tpu.memory_space<vmem>>, vector<1x16xf32>
    %92 = vector.broadcast %91 : vector<1x16xf32> to vector<8x16xf32>
    %93 = arith.addf %92, %85 : vector<8x16xf32>
    %c2_40 = arith.constant 2 : index
    %94 = memref.load %arg2[%c2_40] : memref<4xf32, #tpu.memory_space<smem>>
    %95 = vector.broadcast %94 : f32 to vector<8x16xf32>
    %96 = arith.addf %93, %95 : vector<8x16xf32>
    %c4 = arith.constant 4 : index
    %c0_41 = arith.constant 0 : index
    %97 = vector.load %arg3[%c4, %c0_41] : memref<8x16xf32, #tpu.memory_space<vmem>>, vector<1x16xf32>
    %98 = vector.broadcast %97 : vector<1x16xf32> to vector<8x16xf32>
    %99 = arith.addf %98, %90 : vector<8x16xf32>
    %c3_42 = arith.constant 3 : index
    %100 = memref.load %arg2[%c3_42] : memref<4xf32, #tpu.memory_space<smem>>
    %101 = vector.broadcast %100 : f32 to vector<8x16xf32>
    %102 = arith.addf %99, %101 : vector<8x16xf32>
    %cst_43 = arith.constant 0.00999999977 : f32
    %103 = vector.broadcast %cst_43 : f32 to vector<8x16xf32>
    %104 = arith.mulf %103, %96 : vector<8x16xf32>
    %105 = arith.maximumf %96, %104 : vector<8x16xf32>
    %cst_44 = arith.constant 0.00999999977 : f32
    %106 = vector.broadcast %cst_44 : f32 to vector<8x16xf32>
    %107 = arith.mulf %106, %102 : vector<8x16xf32>
    %108 = arith.maximumf %102, %107 : vector<8x16xf32>
    %109 = vector.shape_cast %105 : vector<8x16xf32> to vector<8x16x1xf32>
    %c0_45 = arith.constant 0 : index
    %c0_46 = arith.constant 0 : index
    %110 = vector.load %arg11[%c0_45, %c0_46] : memref<2x128xf32, #tpu.memory_space<vmem>>, vector<1x128xf32>
    %111 = vector.shape_cast %110 : vector<1x128xf32> to vector<1x1x128xf32>
    %112 = vector.broadcast %109 : vector<8x16x1xf32> to vector<8x16x128xf32>
    %113 = vector.broadcast %111 : vector<1x1x128xf32> to vector<8x16x128xf32>
    %114 = arith.mulf %112, %113 : vector<8x16x128xf32>
    %115 = vector.shape_cast %108 : vector<8x16xf32> to vector<8x16x1xf32>
    %c1_47 = arith.constant 1 : index
    %c0_48 = arith.constant 0 : index
    %116 = vector.load %arg11[%c1_47, %c0_48] : memref<2x128xf32, #tpu.memory_space<vmem>>, vector<1x128xf32>
    %117 = vector.shape_cast %116 : vector<1x128xf32> to vector<1x1x128xf32>
    %118 = vector.broadcast %115 : vector<8x16x1xf32> to vector<8x16x128xf32>
    %119 = vector.broadcast %117 : vector<1x1x128xf32> to vector<8x16x128xf32>
    %120 = arith.mulf %118, %119 : vector<8x16x128xf32>
    %121 = arith.addf %114, %120 : vector<8x16x128xf32>
    %c0_49 = arith.constant 0 : index
    %c0_50 = arith.constant 0 : index
    %122 = vector.load %arg12[%c0_49, %c0_50] : memref<1x128xf32, #tpu.memory_space<vmem>>, vector<1x128xf32>
    %123 = vector.shape_cast %122 : vector<1x128xf32> to vector<1x1x128xf32>
    %124 = vector.broadcast %123 : vector<1x1x128xf32> to vector<8x16x128xf32>
    %125 = arith.addf %121, %124 : vector<8x16x128xf32>
    %cst_51 = arith.constant 0.000000e+00 : f32
    %126 = vector.broadcast %cst_51 : f32 to vector<8x16x128xf32>
    %127 = arith.maximumf %125, %126 : vector<8x16x128xf32>
    %c0_52 = arith.constant 0 : index
    %c0_53 = arith.constant 0 : index
    %128 = vector.load %arg16[%c0_52, %c0_53] : memref<8x128xf32, #tpu.memory_space<vmem>>, vector<8x128xf32>
    %129 = vector.broadcast %27 : vector<8x1xf32> to vector<8x128xf32>
    %130 = arith.mulf %129, %128 : vector<8x128xf32>
    %131 = vector.shape_cast %32 : vector<8x16xf32> to vector<8x16x1xf32>
    %132 = vector.broadcast %131 : vector<8x16x1xf32> to vector<8x16x128xf32>
    %133 = arith.mulf %132, %127 : vector<8x16x128xf32>
    %cst_54 = arith.constant dense<0.000000e+00> : vector<8x128xf32>
    %134 = vector.multi_reduction <add>, %133, %cst_54 [1] : vector<8x16x128xf32> to vector<8x128xf32>
    %135 = arith.addf %130, %134 : vector<8x128xf32>
    %c0_55 = arith.constant 0 : index
    %c0_56 = arith.constant 0 : index
    %136 = vector.load %arg16[%c0_55, %c0_56] : memref<8x128xf32, #tpu.memory_space<vmem>>, vector<8x128xf32>
    tpu.vector_store %arg16[%c0_55, %c0_56], %135 {strides = array<i32>} : memref<8x128xf32, #tpu.memory_space<vmem>>, vector<8x128xf32>,
    %c0_i32_57 = arith.constant 0 : i32
    %137 = arith.cmpi eq, %arg1, %c0_i32_57 : i32
    %138 = arith.extui %137 : i1 to i32
    %c0_i32_58 = arith.constant 0 : i32
    %139 = arith.cmpi ne, %138, %c0_i32_58 : i32
    scf.if %139 {
      %c0_59 = arith.constant 0 : index
      %c0_60 = arith.constant 0 : index
      %140 = vector.load %arg16[%c0_59, %c0_60] : memref<8x128xf32, #tpu.memory_space<vmem>>, vector<8x128xf32>
      %c0_61 = arith.constant 0 : index
      %c0_62 = arith.constant 0 : index
      %141 = vector.load %arg15[%c0_61, %c0_62] : memref<8x1xf32, #tpu.memory_space<vmem>>, vector<8x1xf32>
      %142 = tpu.reciprocal %141 {approx = true} : vector<8x1xf32> -> vector<8x1xf32>
      %143 = vector.broadcast %142 : vector<8x1xf32> to vector<8x128xf32>
      %144 = arith.mulf %140, %143 : vector<8x128xf32>
      %c0_63 = arith.constant 0 : index
      %c0_64 = arith.constant 0 : index
      %145 = vector.load %arg7[%c0_63, %c0_64] : memref<8x128xf32, #tpu.memory_space<vmem>>, vector<8x128xf32>
      %146 = arith.addf %144, %145 : vector<8x128xf32>
      %c0_65 = arith.constant 0 : index
      %c0_66 = arith.constant 0 : index
      %147 = vector.load %arg13[%c0_65, %c0_66] : memref<8x128xf32, #tpu.memory_space<vmem>>, vector<8x128xf32>
      tpu.vector_store %arg13[%c0_65, %c0_66], %146 {strides = array<i32>} : memref<8x128xf32, #tpu.memory_space<vmem>>, vector<8x128xf32>,
    } else {
    }
    return
  }
  func.func @transform_0(%arg0: i32, %arg1: i32) -> i32 {
    %c0_i32 = arith.constant 0 : i32
    %c0_i32_0 = arith.constant 0 : i32
    return %c0_i32 : i32
  }
  func.func @transform_1(%arg0: i32, %arg1: i32) -> (i32, i32) {
    %c0_i32 = arith.constant 0 : i32
    %c0_i32_0 = arith.constant 0 : i32
    return %c0_i32, %arg1 : i32, i32
  }
  func.func @transform_2(%arg0: i32, %arg1: i32) -> (i32, i32) {
    %c0_i32 = arith.constant 0 : i32
    %c0_i32_0 = arith.constant 0 : i32
    return %arg0, %c0_i32 : i32, i32
  }
  func.func @transform_3(%arg0: i32, %arg1: i32) -> (i32, i32) {
    %c0_i32 = arith.constant 0 : i32
    %c0_i32_0 = arith.constant 0 : i32
    return %arg0, %c0_i32 : i32, i32
  }
  func.func @transform_4(%arg0: i32, %arg1: i32) -> (i32, i32) {
    %c0_i32 = arith.constant 0 : i32
    %c0_i32_0 = arith.constant 0 : i32
    return %arg0, %c0_i32 : i32, i32
  }
  func.func @transform_5(%arg0: i32, %arg1: i32) -> (i32, i32) {
    %c0_i32 = arith.constant 0 : i32
    %c0_i32_0 = arith.constant 0 : i32
    return %arg0, %c0_i32 : i32, i32
  }
  func.func @transform_6(%arg0: i32, %arg1: i32) -> (i32, i32) {
    %c0_i32 = arith.constant 0 : i32
    %c0_i32_0 = arith.constant 0 : i32
    %c0_i32_1 = arith.constant 0 : i32
    return %c0_i32, %c0_i32_0 : i32, i32
  }
  func.func @transform_7(%arg0: i32, %arg1: i32) -> (i32, i32) {
    %c0_i32 = arith.constant 0 : i32
    %c0_i32_0 = arith.constant 0 : i32
    %c0_i32_1 = arith.constant 0 : i32
    return %c0_i32, %c0_i32_0 : i32, i32
  }
  func.func @transform_8(%arg0: i32, %arg1: i32) -> (i32, i32) {
    %c0_i32 = arith.constant 0 : i32
    %c0_i32_0 = arith.constant 0 : i32
    %c0_i32_1 = arith.constant 0 : i32
    return %c0_i32, %c0_i32_0 : i32, i32
  }
  func.func @transform_9(%arg0: i32, %arg1: i32) -> (i32, i32) {
    %c0_i32 = arith.constant 0 : i32
    %c0_i32_0 = arith.constant 0 : i32
    %c0_i32_1 = arith.constant 0 : i32
    return %c0_i32, %c0_i32_0 : i32, i32
  }
  func.func @transform_10(%arg0: i32, %arg1: i32) -> (i32, i32) {
    %c0_i32 = arith.constant 0 : i32
    %c0_i32_0 = arith.constant 0 : i32
    %c0_i32_1 = arith.constant 0 : i32
    return %c0_i32, %c0_i32_0 : i32, i32
  }
  func.func @transform_11(%arg0: i32, %arg1: i32) -> (i32, i32) {
    %c0_i32 = arith.constant 0 : i32
    %c0_i32_0 = arith.constant 0 : i32
    return %arg0, %c0_i32 : i32, i32
  }
}

</mosaic_0001>

<llo_original>
// kernel: tpu_custom_call.1
$region0: #{tpu_custom_call.1}
  #allocation0 [shape = 'u32[]', space=smem, size = 0x4, offset = 0x4, fixed_abs, tag = 'smem constant byte address 0x4 - core index']
  #allocation1 [shape = 'u32[144,128]{1,0:T(1,128)}', space=vmem, size = 0x12000, scoped, tag = 'internal scratch']
  #allocation2 [shape = 'f32[8,1]{1,0:T(8,128)}', space=vmem, size = 0x1000, scoped, tag = 'scratch operand']
  #allocation3 [shape = 'f32[8,1]{1,0:T(8,128)}', space=vmem, size = 0x1000, scoped, tag = 'scratch operand']
  #allocation4 [shape = 'f32[8,128]{1,0:T(8,128)}', space=vmem, size = 0x1000, scoped, tag = 'scratch operand']
  %s0 = inlined_call_operand.vmem [shape: f32[4], index: 0, kind: input, shape index: {}]
  %s1 = inlined_call_operand.vmem [shape: f32[8,16], index: 1, kind: input, shape index: {}]
  %s2 = inlined_call_operand.vmem [shape: f32[16,1], index: 2, kind: input, shape index: {}]
  %s3 = inlined_call_operand.vmem [shape: f32[16,1], index: 3, kind: input, shape index: {}]
  %s4 = inlined_call_operand.vmem [shape: f32[16,1], index: 4, kind: input, shape index: {}]
  %s5 = inlined_call_operand.vmem [shape: f32[16,128], index: 5, kind: input, shape index: {}]
  %s6 = inlined_call_operand.vmem [shape: f32[2,128], index: 6, kind: input, shape index: {}]
  %s7 = inlined_call_operand.vmem [shape: f32[1,128], index: 7, kind: input, shape index: {}]
  %s8 = inlined_call_operand.vmem [shape: f32[2,128], index: 8, kind: input, shape index: {}]
  %s9 = inlined_call_operand.vmem [shape: f32[2,128], index: 9, kind: input, shape index: {}]
  %s10 = inlined_call_operand.vmem [shape: f32[1,128], index: 10, kind: input, shape index: {}]
  %s11 = inlined_call_operand.hbm [shape: f32[16,128], index: 11, kind: output, shape index: {}]
  %s12 = sld [smem:[#allocation0]]
  $region89: #{tpu_custom_call.1} parent=0
    _
  %s14 = ssub.s32 1, %s12
  %s15 = scalar_select 0, %s14, %s12
  $region1: #{tpu_custom_call.1} parent=0
    #allocation5 [shape = 'u8[512]{0}', space=smem, size = 0x200, scoped, tag = 'input window, operand 0, single buffered']
    #allocation6 [shape = 's32[2]{0}', space=sflag, size = 0x8, scoped, tag = 'scoped memory for tpu_custom_call.1']
    #allocation7 [shape = 's32[2]{0}', space=sflag, size = 0x8, scoped, tag = 'scoped memory for tpu_custom_call.1']
    #allocation8 [shape = 'u8[8192]{0}', space=vmem, size = 0x2000, scoped, tag = 'output window, operand 0']
    %16 = vsyncpa [#allocation7], 0
    %17 = vsyncpa [#allocation6], 0
    %s18 = scalar_lea.sflag [#allocation6], 1
    %19 = vsyncpa %s18, 0
    loop: start=0, step=1, limit=4
    $region2: #{tpu_custom_call.1} parent=1 // loop_pre_header
      _
    $region3: #{tpu_custom_call.1} parent=1 // loop_header
      %s21 = sphi 0, %s25
      %p22 = scmp.ge.s32.totalorder %s21, 4
      %s28 = sphi 0, %s40
      %s29 = sphi 0, %s36
      %s30 = sphi 0, %s28
      %s31 = sphi 0, %s29
      %s32 = sphi 0, %s30
      %s33 = sphi 0, %s31
      %s41 = sphi 0, %s41
      %s43 = sphi 0, %s41
      %s44 = sphi 0, %s43
      %s58 = sphi 0, %s44
      %s64 = sphi 0, %s66
      %s67 = sphi 0, %s64
      %s68 = sphi 0, %s67
      %s84 = sphi 0, %s68
      %s90 = sphi 0, %s92
      %s93 = sphi 0, %s90
      %s94 = sphi 0, %s93
      %s110 = sphi 0, %s94
      %s116 = sphi 0, %s118
      %s119 = sphi 0, %s116
      %s120 = sphi 0, %s119
      %s136 = sphi 0, %s120
      %s142 = sphi 0, %s144
      %s145 = sphi 0, %s142
      %s146 = sphi 0, %s145
      %s162 = sphi 0, %s146
      %s168 = sphi 0, %s170
      %s171 = sphi 0, %s168
      %s172 = sphi 0, %s171
      %s188 = sphi 0, %s172
      %s192 = sphi 0, %s192
      %s194 = sphi 0, %s192
      %s195 = sphi 0, %s194
      %s209 = sphi 0, %s195
      %s213 = sphi 0, %s213
      %s215 = sphi 0, %s213
      %s216 = sphi 0, %s215
      %s230 = sphi 0, %s216
      %s234 = sphi 0, %s234
      %s236 = sphi 0, %s234
      %s237 = sphi 0, %s236
      %s251 = sphi 0, %s237
      %s255 = sphi 0, %s255
      %s257 = sphi 0, %s255
      %s258 = sphi 0, %s257
      %s272 = sphi 0, %s258
      %s276 = sphi 0, %s276
      %s278 = sphi 0, %s276
      %s279 = sphi 0, %s278
      %s293 = sphi 0, %s279
      %s299 = sphi 0, %s301
      %s302 = sphi 0, %s299
      %s303 = sphi 0, %s302
      %s319 = sphi 0, %s303
    $region4: #{tpu_custom_call.1} parent=1 // loop_header_branch
      %24 = sbr.rel (%p22) target = $region8
    $region5: #{tpu_custom_call.1} parent=1 // loop_body
      %s26 = ssub.s32 %s21, 1
      %s27 = ssub.s32 %s21, 2
      %s34 = sadd.s32 1, %s29
      %p35 = scmp.ge.s32.totalorder %s34, 1
      %s36 = scalar_select %p35, 0, %s34
      %s37 = sadd.s32 1, %s28
      %s38 = scalar_select %p35, %s37, %s28
      %p39 = scmp.ge.s32.totalorder %s38, 2
      %s40 = scalar_select %p39, 0, %s38
      %s42 = sadd.s32 %s41, 1
      %p45 = scmp.eq.s32.totalorder %s21, 1
      %p46 = scmp.ne.s32.totalorder %s41, %s43
      %p47 = scmp.eq.s32.totalorder %s21, 0
      %p48 = por %p46, %p47
      %p49 = scmp.ne.s32.totalorder %s41, %s43
      %p50 = scmp.eq.s32.totalorder %s26, 1
      %p51 = por %p49, %p50
      %p52 = scmp.ne.s32.totalorder %s43, %s44
      %p53 = scmp.eq.s32.totalorder %s26, 0
      %p54 = por %p52, %p53
      %p55 = scmp.ne.s32.totalorder %s43, %s44
      %p56 = scmp.eq.s32.totalorder %s27, 1
      %p57 = por %p55, %p56
      %p59 = scmp.ne.s32.totalorder %s44, %s58
      %p60 = scmp.eq.s32.totalorder %s27, 0
      %p61 = por %p59, %p60
      %s62 = ssub.s32 %s29, %s36
      %p63 = scmp.eq.s32.totalorder %s62, 0
      %s65 = sadd.s32 %s64, 1
      %s66 = scalar_select %p63, %s64, %s65
      %p69 = pneg %p63
      %p70 = scmp.eq.s32.totalorder %s21, 1
      %p71 = por %p69, %p70
      %p72 = scmp.ne.s32.totalorder %s64, %s67
      %p73 = scmp.eq.s32.totalorder %s21, 0
      %p74 = por %p72, %p73
      %p75 = scmp.ne.s32.totalorder %s64, %s67
      %p76 = scmp.eq.s32.totalorder %s26, 1
      %p77 = por %p75, %p76
      %p78 = scmp.ne.s32.totalorder %s67, %s68
      %p79 = scmp.eq.s32.totalorder %s26, 0
      %p80 = por %p78, %p79
      %p81 = scmp.ne.s32.totalorder %s67, %s68
      %p82 = scmp.eq.s32.totalorder %s27, 1
      %p83 = por %p81, %p82
      %p85 = scmp.ne.s32.totalorder %s68, %s84
      %p86 = scmp.eq.s32.totalorder %s27, 0
      %p87 = por %p85, %p86
      %s88 = ssub.s32 %s28, %s40
      %p89 = scmp.eq.s32.totalorder %s88, 0
      %s91 = sadd.s32 %s90, 1
      %s92 = scalar_select %p89, %s90, %s91
      %p95 = pneg %p89
      %p96 = scmp.eq.s32.totalorder %s21, 1
      %p97 = por %p95, %p96
      %p98 = scmp.ne.s32.totalorder %s90, %s93
      %p99 = scmp.eq.s32.totalorder %s21, 0
      %p100 = por %p98, %p99
      %p101 = scmp.ne.s32.totalorder %s90, %s93
      %p102 = scmp.eq.s32.totalorder %s26, 1
      %p103 = por %p101, %p102
      %p104 = scmp.ne.s32.totalorder %s93, %s94
      %p105 = scmp.eq.s32.totalorder %s26, 0
      %p106 = por %p104, %p105
      %p107 = scmp.ne.s32.totalorder %s93, %s94
      %p108 = scmp.eq.s32.totalorder %s27, 1
      %p109 = por %p107, %p108
      %p111 = scmp.ne.s32.totalorder %s94, %s110
      %p112 = scmp.eq.s32.totalorder %s27, 0
      %p113 = por %p111, %p112
      %s114 = ssub.s32 %s28, %s40
      %p115 = scmp.eq.s32.totalorder %s114, 0
      %s117 = sadd.s32 %s116, 1
      %s118 = scalar_select %p115, %s116, %s117
      %p121 = pneg %p115
      %p122 = scmp.eq.s32.totalorder %s21, 1
      %p123 = por %p121, %p122
      %p124 = scmp.ne.s32.totalorder %s116, %s119
      %p125 = scmp.eq.s32.totalorder %s21, 0
      %p126 = por %p124, %p125
      %p127 = scmp.ne.s32.totalorder %s116, %s119
      %p128 = scmp.eq.s32.totalorder %s26, 1
      %p129 = por %p127, %p128
      %p130 = scmp.ne.s32.totalorder %s119, %s120
      %p131 = scmp.eq.s32.totalorder %s26, 0
      %p132 = por %p130, %p131
      %p133 = scmp.ne.s32.totalorder %s119, %s120
      %p134 = scmp.eq.s32.totalorder %s27, 1
      %p135 = por %p133, %p134
      %p137 = scmp.ne.s32.totalorder %s120, %s136
      %p138 = scmp.eq.s32.totalorder %s27, 0
      %p139 = por %p137, %p138
      %s140 = ssub.s32 %s28, %s40
      %p141 = scmp.eq.s32.totalorder %s140, 0
      %s143 = sadd.s32 %s142, 1
      %s144 = scalar_select %p141, %s142, %s143
      %p147 = pneg %p141
      %p148 = scmp.eq.s32.totalorder %s21, 1
      %p149 = por %p147, %p148
      %p150 = scmp.ne.s32.totalorder %s142, %s145
      %p151 = scmp.eq.s32.totalorder %s21, 0
      %p152 = por %p150, %p151
      %p153 = scmp.ne.s32.totalorder %s142, %s145
      %p154 = scmp.eq.s32.totalorder %s26, 1
      %p155 = por %p153, %p154
      %p156 = scmp.ne.s32.totalorder %s145, %s146
      %p157 = scmp.eq.s32.totalorder %s26, 0
      %p158 = por %p156, %p157
      %p159 = scmp.ne.s32.totalorder %s145, %s146
      %p160 = scmp.eq.s32.totalorder %s27, 1
      %p161 = por %p159, %p160
      %p163 = scmp.ne.s32.totalorder %s146, %s162
      %p164 = scmp.eq.s32.totalorder %s27, 0
      %p165 = por %p163, %p164
      %s166 = ssub.s32 %s28, %s40
      %p167 = scmp.eq.s32.totalorder %s166, 0
      %s169 = sadd.s32 %s168, 1
      %s170 = scalar_select %p167, %s168, %s169
      %p173 = pneg %p167
      %p174 = scmp.eq.s32.totalorder %s21, 1
      %p175 = por %p173, %p174
      %p176 = scmp.ne.s32.totalorder %s168, %s171
      %p177 = scmp.eq.s32.totalorder %s21, 0
      %p178 = por %p176, %p177
      %p179 = scmp.ne.s32.totalorder %s168, %s171
      %p180 = scmp.eq.s32.totalorder %s26, 1
      %p181 = por %p179, %p180
      %p182 = scmp.ne.s32.totalorder %s171, %s172
      %p183 = scmp.eq.s32.totalorder %s26, 0
      %p184 = por %p182, %p183
      %p185 = scmp.ne.s32.totalorder %s171, %s172
      %p186 = scmp.eq.s32.totalorder %s27, 1
      %p187 = por %p185, %p186
      %p189 = scmp.ne.s32.totalorder %s172, %s188
      %p190 = scmp.eq.s32.totalorder %s27, 0
      %p191 = por %p189, %p190
      %s193 = sadd.s32 %s192, 1
      %p196 = scmp.eq.s32.totalorder %s21, 1
      %p197 = scmp.ne.s32.totalorder %s192, %s194
      %p198 = scmp.eq.s32.totalorder %s21, 0
      %p199 = por %p197, %p198
      %p200 = scmp.ne.s32.totalorder %s192, %s194
      %p201 = scmp.eq.s32.totalorder %s26, 1
      %p202 = por %p200, %p201
      %p203 = scmp.ne.s32.totalorder %s194, %s195
      %p204 = scmp.eq.s32.totalorder %s26, 0
      %p205 = por %p203, %p204
      %p206 = scmp.ne.s32.totalorder %s194, %s195
      %p207 = scmp.eq.s32.totalorder %s27, 1
      %p208 = por %p206, %p207
      %p210 = scmp.ne.s32.totalorder %s195, %s209
      %p211 = scmp.eq.s32.totalorder %s27, 0
      %p212 = por %p210, %p211
      %s214 = sadd.s32 %s213, 1
      %p217 = scmp.eq.s32.totalorder %s21, 1
      %p218 = scmp.ne.s32.totalorder %s213, %s215
      %p219 = scmp.eq.s32.totalorder %s21, 0
      %p220 = por %p218, %p219
      %p221 = scmp.ne.s32.totalorder %s213, %s215
      %p222 = scmp.eq.s32.totalorder %s26, 1
      %p223 = por %p221, %p222
      %p224 = scmp.ne.s32.totalorder %s215, %s216
      %p225 = scmp.eq.s32.totalorder %s26, 0
      %p226 = por %p224, %p225
      %p227 = scmp.ne.s32.totalorder %s215, %s216
      %p228 = scmp.eq.s32.totalorder %s27, 1
      %p229 = por %p227, %p228
      %p231 = scmp.ne.s32.totalorder %s216, %s230
      %p232 = scmp.eq.s32.totalorder %s27, 0
      %p233 = por %p231, %p232
      %s235 = sadd.s32 %s234, 1
      %p238 = scmp.eq.s32.totalorder %s21, 1
      %p239 = scmp.ne.s32.totalorder %s234, %s236
      %p240 = scmp.eq.s32.totalorder %s21, 0
      %p241 = por %p239, %p240
      %p242 = scmp.ne.s32.totalorder %s234, %s236
      %p243 = scmp.eq.s32.totalorder %s26, 1
      %p244 = por %p242, %p243
      %p245 = scmp.ne.s32.totalorder %s236, %s237
      %p246 = scmp.eq.s32.totalorder %s26, 0
      %p247 = por %p245, %p246
      %p248 = scmp.ne.s32.totalorder %s236, %s237
      %p249 = scmp.eq.s32.totalorder %s27, 1
      %p250 = por %p248, %p249
      %p252 = scmp.ne.s32.totalorder %s237, %s251
      %p253 = scmp.eq.s32.totalorder %s27, 0
      %p254 = por %p252, %p253
      %s256 = sadd.s32 %s255, 1
      %p259 = scmp.eq.s32.totalorder %s21, 1
      %p260 = scmp.ne.s32.totalorder %s255, %s257
      %p261 = scmp.eq.s32.totalorder %s21, 0
      %p262 = por %p260, %p261
      %p263 = scmp.ne.s32.totalorder %s255, %s257
      %p264 = scmp.eq.s32.totalorder %s26, 1
      %p265 = por %p263, %p264
      %p266 = scmp.ne.s32.totalorder %s257, %s258
      %p267 = scmp.eq.s32.totalorder %s26, 0
      %p268 = por %p266, %p267
      %p269 = scmp.ne.s32.totalorder %s257, %s258
      %p270 = scmp.eq.s32.totalorder %s27, 1
      %p271 = por %p269, %p270
      %p273 = scmp.ne.s32.totalorder %s258, %s272
      %p274 = scmp.eq.s32.totalorder %s27, 0
      %p275 = por %p273, %p274
      %s277 = sadd.s32 %s276, 1
      %p280 = scmp.eq.s32.totalorder %s21, 1
      %p281 = scmp.ne.s32.totalorder %s276, %s278
      %p282 = scmp.eq.s32.totalorder %s21, 0
      %p283 = por %p281, %p282
      %p284 = scmp.ne.s32.totalorder %s276, %s278
      %p285 = scmp.eq.s32.totalorder %s26, 1
      %p286 = por %p284, %p285
      %p287 = scmp.ne.s32.totalorder %s278, %s279
      %p288 = scmp.eq.s32.totalorder %s26, 0
      %p289 = por %p287, %p288
      %p290 = scmp.ne.s32.totalorder %s278, %s279
      %p291 = scmp.eq.s32.totalorder %s27, 1
      %p292 = por %p290, %p291
      %p294 = scmp.ne.s32.totalorder %s279, %s293
      %p295 = scmp.eq.s32.totalorder %s27, 0
      %p296 = por %p294, %p295
      %s297 = ssub.s32 %s28, %s40
      %p298 = scmp.eq.s32.totalorder %s297, 0
      %s300 = sadd.s32 %s299, 1
      %s301 = scalar_select %p298, %s299, %s300
      %p304 = pneg %p298
      %p305 = scmp.eq.s32.totalorder %s21, 1
      %p306 = por %p304, %p305
      %p307 = scmp.ne.s32.totalorder %s299, %s302
      %p308 = scmp.eq.s32.totalorder %s21, 0
      %p309 = por %p307, %p308
      %p310 = scmp.ne.s32.totalorder %s299, %s302
      %p311 = scmp.eq.s32.totalorder %s26, 1
      %p312 = por %p310, %p311
      %p313 = scmp.ne.s32.totalorder %s302, %s303
      %p314 = scmp.eq.s32.totalorder %s26, 0
      %p315 = por %p313, %p314
      %p316 = scmp.ne.s32.totalorder %s302, %s303
      %p317 = scmp.eq.s32.totalorder %s27, 1
      %p318 = por %p316, %p317
      %p320 = scmp.ne.s32.totalorder %s303, %s319
      %p321 = scmp.eq.s32.totalorder %s27, 0
      %p322 = por %p320, %p321
      %p323 = scmp.le.s32.totalorder 1, %s21
      %p324 = scmp.lt.s32.totalorder %s21, 3
      %p325 = pnand %p323, %p324
      %p326 = pneg %p325
      // Predicated region
      $region9: #{tpu_custom_call.1} parent=5 // pred_check
        _
      $region10: #{tpu_custom_call.1} parent=5 // pred_check_branch
        %328 = sbr.rel (%p325) target = $region12
      $region11: #{tpu_custom_call.1} parent=5 // pred_region
        %s329 = ssub.s32 %s21, 1
        // Predicated region
        $region13: #{tpu_custom_call.1} parent=11 // pred_check
          %p330 = pneg %p54
        $region14: #{tpu_custom_call.1} parent=11 // pred_check_branch
          %332 = sbr.rel (%p330) target = $region16
        $region15: #{tpu_custom_call.1} parent=11 // pred_region
          %s334 = ssub.s32 16, 16
          %335 = vsyncadd [#allocation7], %s334
          %s337 = sshll.u32 %s0, 4
          %s338 = int_to_ptr.vmem [resolvable:$true] %s337
          %340 = dma.vmem_to_smem %s338, 16, [#allocation5], [#allocation7]
        $region16: #{tpu_custom_call.1} parent=11 // pred_fallthru
          _
        // Predicated region
        $region17: #{tpu_custom_call.1} parent=11 // pred_check
          %p341 = pneg %p80
        $region18: #{tpu_custom_call.1} parent=11 // pred_check_branch
          %343 = sbr.rel (%p341) target = $region20
        $region19: #{tpu_custom_call.1} parent=11 // pred_region
          %p344 = scmp.lt.s32.totalorder %s31, 0
          %s345 = scalar_select %p344, %s31, 0
          %s346 = smul.addr %s345, 8
          %s347 = scalar_lea.vmem %s1, %s346
        $region20: #{tpu_custom_call.1} parent=11 // pred_fallthru
          _
        // Predicated region
        $region21: #{tpu_custom_call.1} parent=11 // pred_check
          %p348 = pneg %p205
        $region22: #{tpu_custom_call.1} parent=11 // pred_check_branch
          %350 = sbr.rel (%p348) target = $region24
        $region23: #{tpu_custom_call.1} parent=11 // pred_region
          _
        $region24: #{tpu_custom_call.1} parent=11 // pred_fallthru
          _
        // Predicated region
        $region25: #{tpu_custom_call.1} parent=11 // pred_check
          %p351 = pneg %p226
        $region26: #{tpu_custom_call.1} parent=11 // pred_check_branch
          %353 = sbr.rel (%p351) target = $region28
        $region27: #{tpu_custom_call.1} parent=11 // pred_region
          _
        $region28: #{tpu_custom_call.1} parent=11 // pred_fallthru
          _
        // Predicated region
        $region29: #{tpu_custom_call.1} parent=11 // pred_check
          %p354 = pneg %p247
        $region30: #{tpu_custom_call.1} parent=11 // pred_check_branch
          %356 = sbr.rel (%p354) target = $region32
        $region31: #{tpu_custom_call.1} parent=11 // pred_region
          _
        $region32: #{tpu_custom_call.1} parent=11 // pred_fallthru
          _
        // Predicated region
        $region33: #{tpu_custom_call.1} parent=11 // pred_check
          %p357 = pneg %p268
        $region34: #{tpu_custom_call.1} parent=11 // pred_check_branch
          %359 = sbr.rel (%p357) target = $region36
        $region35: #{tpu_custom_call.1} parent=11 // pred_region
          _
        $region36: #{tpu_custom_call.1} parent=11 // pred_fallthru
          _
        // Predicated region
        $region37: #{tpu_custom_call.1} parent=11 // pred_check
          %p360 = pneg %p289
        $region38: #{tpu_custom_call.1} parent=11 // pred_check_branch
          %362 = sbr.rel (%p360) target = $region40
        $region39: #{tpu_custom_call.1} parent=11 // pred_region
          _
        $region40: #{tpu_custom_call.1} parent=11 // pred_fallthru
          _
      $region12: #{tpu_custom_call.1} parent=5 // pred_fallthru
        _
      %p363 = scmp.lt.s32.totalorder %s21, 2
      // Predicated region
      $region41: #{tpu_custom_call.1} parent=5 // pred_check
        %p364 = pneg %p363
      $region42: #{tpu_custom_call.1} parent=5 // pred_check_branch
        %366 = sbr.rel (%p364) target = $region44
      $region43: #{tpu_custom_call.1} parent=5 // pred_region
        // Predicated region
        $region45: #{tpu_custom_call.1} parent=43 // pred_check
          %p367 = pneg %p100
        $region46: #{tpu_custom_call.1} parent=43 // pred_check_branch
          %369 = sbr.rel (%p367) target = $region48
        $region47: #{tpu_custom_call.1} parent=43 // pred_region
          %p370 = scmp.lt.s32.totalorder %s28, 1
          %s371 = scalar_select %p370, %s28, 1
          %s372 = smul.addr %s371, 8
          %s373 = scalar_lea.vmem %s2, %s372
        $region48: #{tpu_custom_call.1} parent=43 // pred_fallthru
          _
        // Predicated region
        $region49: #{tpu_custom_call.1} parent=43 // pred_check
          %p374 = pneg %p126
        $region50: #{tpu_custom_call.1} parent=43 // pred_check_branch
          %376 = sbr.rel (%p374) target = $region52
        $region51: #{tpu_custom_call.1} parent=43 // pred_region
          %p377 = scmp.lt.s32.totalorder %s28, 1
          %s378 = scalar_select %p377, %s28, 1
          %s379 = smul.addr %s378, 8
          %s380 = scalar_lea.vmem %s3, %s379
        $region52: #{tpu_custom_call.1} parent=43 // pred_fallthru
          _
        // Predicated region
        $region53: #{tpu_custom_call.1} parent=43 // pred_check
          %p381 = pneg %p152
        $region54: #{tpu_custom_call.1} parent=43 // pred_check_branch
          %383 = sbr.rel (%p381) target = $region56
        $region55: #{tpu_custom_call.1} parent=43 // pred_region
          %p384 = scmp.lt.s32.totalorder %s28, 1
          %s385 = scalar_select %p384, %s28, 1
          %s386 = smul.addr %s385, 8
          %s387 = scalar_lea.vmem %s4, %s386
        $region56: #{tpu_custom_call.1} parent=43 // pred_fallthru
          _
        // Predicated region
        $region57: #{tpu_custom_call.1} parent=43 // pred_check
          %p388 = pneg %p178
        $region58: #{tpu_custom_call.1} parent=43 // pred_check_branch
          %390 = sbr.rel (%p388) target = $region60
        $region59: #{tpu_custom_call.1} parent=43 // pred_region
          %p391 = scmp.lt.s32.totalorder %s28, 1
          %s392 = scalar_select %p391, %s28, 1
          %s393 = smul.addr %s392, 8
          %s394 = scalar_lea.vmem %s5, %s393
        $region60: #{tpu_custom_call.1} parent=43 // pred_fallthru
          _
      $region44: #{tpu_custom_call.1} parent=5 // pred_fallthru
        _
      %p395 = scmp.le.s32.totalorder 1, %s21
      %p396 = scmp.lt.s32.totalorder %s21, 3
      %p397 = pnand %p395, %p396
      %p398 = pneg %p397
      // Predicated region
      $region61: #{tpu_custom_call.1} parent=5 // pred_check
        _
      $region62: #{tpu_custom_call.1} parent=5 // pred_check_branch
        %400 = sbr.rel (%p397) target = $region64
      $region63: #{tpu_custom_call.1} parent=5 // pred_region
        %s401 = ssub.s32 %s21, 1
        // Predicated region
        $region65: #{tpu_custom_call.1} parent=63 // pred_check
          %p402 = pneg %p54
        $region66: #{tpu_custom_call.1} parent=63 // pred_check_branch
          %404 = sbr.rel (%p402) target = $region68
        $region67: #{tpu_custom_call.1} parent=63 // pred_region
          %405 = dma.done [#allocation7], 16
        $region68: #{tpu_custom_call.1} parent=63 // pred_fallthru
          _
        %406 = sfence
        %p407 = pneg %p54
        %p408 = pneg %p51
        %p409 = scmp.lt.s32.totalorder %s31, 0
        %s410 = scalar_select %p409, %s31, 0
        %s411 = smul.addr %s410, 8
        %s412 = scalar_lea.vmem %s1, %s411
        %p413 = pneg %p80
        %p414 = pneg %p77
        %p415 = scmp.lt.s32.totalorder %s30, 1
        %s416 = scalar_select %p415, %s30, 1
        %s417 = smul.addr %s416, 8
        %s418 = scalar_lea.vmem %s2, %s417
        %p419 = pneg %p106
        %p420 = pneg %p103
        %p421 = scmp.lt.s32.totalorder %s30, 1
        %s422 = scalar_select %p421, %s30, 1
        %s423 = smul.addr %s422, 8
        %s424 = scalar_lea.vmem %s3, %s423
        %p425 = pneg %p132
        %p426 = pneg %p129
        %p427 = scmp.lt.s32.totalorder %s30, 1
        %s428 = scalar_select %p427, %s30, 1
        %s429 = smul.addr %s428, 8
        %s430 = scalar_lea.vmem %s4, %s429
        %p431 = pneg %p158
        %p432 = pneg %p155
        %p433 = scmp.lt.s32.totalorder %s30, 1
        %s434 = scalar_select %p433, %s30, 1
        %s435 = smul.addr %s434, 8
        %s436 = scalar_lea.vmem %s5, %s435
        %p437 = pneg %p184
        %p438 = pneg %p181
        %p439 = pneg %p205
        %p440 = pneg %p202
        %p441 = pneg %p226
        %p442 = pneg %p223
        %p443 = pneg %p247
        %p444 = pneg %p244
        %p445 = pneg %p268
        %p446 = pneg %p265
        %p447 = pneg %p289
        %p448 = pneg %p286
        %p449 = pneg %p315
        %p450 = pneg %p312
        %s451 = sand.u32 %s302, 1
        %s452 = scalar_lea.sflag [#allocation6], %s451
        %s453 = sand.u32 %s302, 1
        %s454 = smul.addr %s453, 8
        %s455 = scalar_lea.vmem [#allocation8], %s454
        %p456 = scmp.lt.s32.totalorder %s31, 0
        %s457 = scalar_select %p456, %s31, 0
        %s458 = smul.addr %s457, 8
        %s459 = scalar_lea.vmem %s1, %s458
        %p460 = scmp.lt.s32.totalorder %s30, 1
        %s461 = scalar_select %p460, %s30, 1
        %s462 = smul.addr %s461, 8
        %s463 = scalar_lea.vmem %s2, %s462
        %p464 = scmp.lt.s32.totalorder %s30, 1
        %s465 = scalar_select %p464, %s30, 1
        %s466 = smul.addr %s465, 8
        %s467 = scalar_lea.vmem %s3, %s466
        %p468 = scmp.lt.s32.totalorder %s30, 1
        %s469 = scalar_select %p468, %s30, 1
        %s470 = smul.addr %s469, 8
        %s471 = scalar_lea.vmem %s4, %s470
        %p472 = scmp.lt.s32.totalorder %s30, 1
        %s473 = scalar_select %p472, %s30, 1
        %s474 = smul.addr %s473, 8
        %s475 = scalar_lea.vmem %s5, %s474
        %p476 = scmp.eq.s32.totalorder %s31, 0
        // Predicated region
        $region69: #{tpu_custom_call.1} parent=63 // pred_check
          %p477 = pneg %p476
        $region70: #{tpu_custom_call.1} parent=63 // pred_check_branch
          %479 = sbr.rel (%p477) target = $region72
        $region71: #{tpu_custom_call.1} parent=63 // pred_region
          %vm480 = vcmask 7168
          %481 = vst.msk [vmem:[#allocation2] sm:$0xff] %vm480, -1e+30
          %482 = vst.msk [vmem:[#allocation3] sm:$0xff] %vm480, 0.0
          %483 = vst [vmem:[#allocation4] sm:$0xff] 0.0
        $region72: #{tpu_custom_call.1} parent=63 // pred_fallthru
          _
        %v484 = vld [vmem:[%s459] sm:$0x1]
        %v485 = vld [vmem:[%s463] sm:$0xff]
        %v486 = vlaneseq
        %v487 = vshrl.u32 %v486, 7
        %v488 = vsub.s32 0, %v487
        %v489 = vrot.slane %v484, %v488
        %491 = vset.pattern.permute.xlu0 0
        %492 = vperm.xlu0 %491, %v485
        %v493 = vpop.permute.xlu0 %492
        %v495 = vadd.f32 %v489, %v493
        %v496 = vmul.f32 %v495, 0.2
        %v497 = vmax.f32 %v495, %v496
        %v498 = vlaneseq
        %v499 = vand.u32 %v498, 127
        %s500 = smul.u32 %s31, 16
        %v501 = vstv %s500
        %v502 = vadd.s32 %v499, %v501
        %v503 = vlaneseq
        %v504 = vshrl.u32 %v503, 7
        %s505 = smul.u32 %s30, 8
        %v506 = vstv %s505
        %v507 = vadd.s32 %v504, %v506
        %vm508 = vcmp.ne.s32.totalorder %v502, %v507
        %v509 = vsel %vm508, %v497, -1e+30
        %v510 = vld [vmem:[#allocation2] sm:$0xff]
        %vm511 = vcmask 130048
        %v512 = vsel %vm511, %v509, -inf
        %513 = vmax.xlane.f32.xlu0 %v512
        %v514 = vpop.xlane.xlu0 %513
        %v515 = vmax.f32 %v510, %v514
        %v516 = vsub.f32 %v510, %v515
        %v517 = vmul.f32 %v516, 1.442695
        %v518 = vpow.pop %v517
        %520 = vset.pattern.permute.xlu0 0
        %521 = vperm.xlu0 %520, %v515
        %v522 = vpop.permute.xlu0 %521
        %v524 = vsub.f32 %v509, %v522
        %v525 = vmul.f32 %v524, 1.442695
        %v526 = vpow.pop %v525
        %v527 = vsel %vm508, %v526, 0.0
        %v528 = vld [vmem:[#allocation3] sm:$0xff]
        %v529 = vmul.f32 %v518, %v528
        %v530 = vsel %vm511, %v527, 0.0
        %531 = vadd.xlane.f32.xlu0 %v530
        %v532 = vpop.xlane.xlu0 %531
        %v533 = vadd.f32 %v529, %v532
        %vm534 = vcmask 7168
        %535 = vst.msk [vmem:[#allocation3] sm:$0xff] %vm534, %v533
        %536 = vst.msk [vmem:[#allocation2] sm:$0xff] %vm534, %v515
        %v537 = vld [vmem:[%s459 + $0x1] sm:$0x1]
        %v538 = vld [vmem:[%s467] sm:$0xff]
        %v539 = vlaneseq
        %v540 = vshrl.u32 %v539, 7
        %v541 = vsub.s32 0, %v540
        %v542 = vrot.slane %v537, %v541
        %544 = vset.pattern.permute.xlu0 0
        %545 = vperm.xlu0 %544, %v538
        %v546 = vpop.permute.xlu0 %545
        %v548 = vadd.f32 %v542, %v546
        %s549 = sld [smem:[#allocation5]]
        %v550 = vstv %s549
        %v551 = vadd.f32 %v548, %v550
        %v552 = vld [vmem:[%s459 + $0x2] sm:$0x1]
        %v553 = vld [vmem:[%s471] sm:$0xff]
        %v554 = vlaneseq
        %v555 = vshrl.u32 %v554, 7
        %v556 = vsub.s32 0, %v555
        %v557 = vrot.slane %v552, %v556
        %559 = vset.pattern.permute.xlu0 0
        %560 = vperm.xlu0 %559, %v553
        %v561 = vpop.permute.xlu0 %560
        %v563 = vadd.f32 %v557, %v561
        %s564 = sld [smem:[#allocation5 + $0x1]]
        %v565 = vstv %s564
        %v566 = vadd.f32 %v563, %v565
        %v567 = vmul.f32 %v551, 0.01
        %v568 = vmax.f32 %v551, %v567
        %v569 = vmul.f32 %v566, 0.01
        %v570 = vmax.f32 %v566, %v569
        %v571 = vlaneseq
        %v572 = vshrl.u32 %v571, 7
        %v573 = vsub.s32 0, %v572
        %v574 = vrot.slane %v568, %v573
        %576 = vbcast.lane.b32.xlu0 %v574, 256
        %v577 = vpop.permute.xlu0 %576
        %s579 = sor.u32 256, 8
        %580 = vbcast.lane.b32.xlu0 %v574, %s579
        %v581 = vpop.permute.xlu0 %580
        %v582 = vlaneseq
        %v583 = vshrl.u32 %v582, 7
        %v584 = vsub.s32 1, %v583
        %v585 = vrot.slane %v568, %v584
        %587 = vbcast.lane.b32.xlu0 %v585, 256
        %v588 = vpop.permute.xlu0 %587
        %s590 = sor.u32 256, 8
        %591 = vbcast.lane.b32.xlu0 %v585, %s590
        %v592 = vpop.permute.xlu0 %591
        %v593 = vlaneseq
        %v594 = vshrl.u32 %v593, 7
        %v595 = vsub.s32 2, %v594
        %v596 = vrot.slane %v568, %v595
        %598 = vbcast.lane.b32.xlu0 %v596, 256
        %v599 = vpop.permute.xlu0 %598
        %s601 = sor.u32 256, 8
        %602 = vbcast.lane.b32.xlu0 %v596, %s601
        %v603 = vpop.permute.xlu0 %602
        %v604 = vlaneseq
        %v605 = vshrl.u32 %v604, 7
        %v606 = vsub.s32 3, %v605
        %v607 = vrot.slane %v568, %v606
        %609 = vbcast.lane.b32.xlu0 %v607, 256
        %v610 = vpop.permute.xlu0 %609
        %s612 = sor.u32 256, 8
        %613 = vbcast.lane.b32.xlu0 %v607, %s612
        %v614 = vpop.permute.xlu0 %613
        %v615 = vlaneseq
        %v616 = vshrl.u32 %v615, 7
        %v617 = vsub.s32 4, %v616
        %v618 = vrot.slane %v568, %v617
        %620 = vbcast.lane.b32.xlu0 %v618, 256
        %v621 = vpop.permute.xlu0 %620
        %s623 = sor.u32 256, 8
        %624 = vbcast.lane.b32.xlu0 %v618, %s623
        %v625 = vpop.permute.xlu0 %624
        %v626 = vlaneseq
        %v627 = vshrl.u32 %v626, 7
        %v628 = vsub.s32 5, %v627
        %v629 = vrot.slane %v568, %v628
        %631 = vbcast.lane.b32.xlu0 %v629, 256
        %v632 = vpop.permute.xlu0 %631
        %s634 = sor.u32 256, 8
        %635 = vbcast.lane.b32.xlu0 %v629, %s634
        %v636 = vpop.permute.xlu0 %635
        %v637 = vlaneseq
        %v638 = vshrl.u32 %v637, 7
        %v639 = vsub.s32 6, %v638
        %v640 = vrot.slane %v568, %v639
        %642 = vbcast.lane.b32.xlu0 %v640, 256
        %v643 = vpop.permute.xlu0 %642
        %s645 = sor.u32 256, 8
        %646 = vbcast.lane.b32.xlu0 %v640, %s645
        %v647 = vpop.permute.xlu0 %646
        %v648 = vlaneseq
        %v649 = vshrl.u32 %v648, 7
        %v650 = vsub.s32 7, %v649
        %v651 = vrot.slane %v568, %v650
        %653 = vbcast.lane.b32.xlu0 %v651, 256
        %v654 = vpop.permute.xlu0 %653
        %s656 = sor.u32 256, 8
        %657 = vbcast.lane.b32.xlu0 %v651, %s656
        %v658 = vpop.permute.xlu0 %657
        %v659 = vld [vmem:[%s6] sm:$0x1]
        %v660 = vlaneseq
        %v661 = vshrl.u32 %v660, 7
        %v662 = vsub.s32 0, %v661
        %v663 = vrot.slane %v659, %v662
        %v664 = vmul.f32 %v577, %v663
        %v665 = vmul.f32 %v581, %v663
        %v666 = vmul.f32 %v588, %v663
        %v667 = vmul.f32 %v592, %v663
        %v668 = vmul.f32 %v599, %v663
        %v669 = vmul.f32 %v603, %v663
        %v670 = vmul.f32 %v610, %v663
        %v671 = vmul.f32 %v614, %v663
        %v672 = vmul.f32 %v621, %v663
        %v673 = vmul.f32 %v625, %v663
        %v674 = vmul.f32 %v632, %v663
        %v675 = vmul.f32 %v636, %v663
        %v676 = vmul.f32 %v643, %v663
        %v677 = vmul.f32 %v647, %v663
        %v678 = vmul.f32 %v654, %v663
        %v679 = vmul.f32 %v658, %v663
        %v680 = vlaneseq
        %v681 = vshrl.u32 %v680, 7
        %v682 = vsub.s32 0, %v681
        %v683 = vrot.slane %v570, %v682
        %685 = vbcast.lane.b32.xlu0 %v683, 256
        %v686 = vpop.permute.xlu0 %685
        %s688 = sor.u32 256, 8
        %689 = vbcast.lane.b32.xlu0 %v683, %s688
        %v690 = vpop.permute.xlu0 %689
        %v691 = vlaneseq
        %v692 = vshrl.u32 %v691, 7
        %v693 = vsub.s32 1, %v692
        %v694 = vrot.slane %v570, %v693
        %696 = vbcast.lane.b32.xlu0 %v694, 256
        %v697 = vpop.permute.xlu0 %696
        %s699 = sor.u32 256, 8
        %700 = vbcast.lane.b32.xlu0 %v694, %s699
        %v701 = vpop.permute.xlu0 %700
        %v702 = vlaneseq
        %v703 = vshrl.u32 %v702, 7
        %v704 = vsub.s32 2, %v703
        %v705 = vrot.slane %v570, %v704
        %707 = vbcast.lane.b32.xlu0 %v705, 256
        %v708 = vpop.permute.xlu0 %707
        %s710 = sor.u32 256, 8
        %711 = vbcast.lane.b32.xlu0 %v705, %s710
        %v712 = vpop.permute.xlu0 %711
        %v713 = vlaneseq
        %v714 = vshrl.u32 %v713, 7
        %v715 = vsub.s32 3, %v714
        %v716 = vrot.slane %v570, %v715
        %718 = vbcast.lane.b32.xlu0 %v716, 256
        %v719 = vpop.permute.xlu0 %718
        %s721 = sor.u32 256, 8
        %722 = vbcast.lane.b32.xlu0 %v716, %s721
        %v723 = vpop.permute.xlu0 %722
        %v724 = vlaneseq
        %v725 = vshrl.u32 %v724, 7
        %v726 = vsub.s32 4, %v725
        %v727 = vrot.slane %v570, %v726
        %729 = vbcast.lane.b32.xlu0 %v727, 256
        %v730 = vpop.permute.xlu0 %729
        %s732 = sor.u32 256, 8
        %733 = vbcast.lane.b32.xlu0 %v727, %s732
        %v734 = vpop.permute.xlu0 %733
        %v735 = vlaneseq
        %v736 = vshrl.u32 %v735, 7
        %v737 = vsub.s32 5, %v736
        %v738 = vrot.slane %v570, %v737
        %740 = vbcast.lane.b32.xlu0 %v738, 256
        %v741 = vpop.permute.xlu0 %740
        %s743 = sor.u32 256, 8
        %744 = vbcast.lane.b32.xlu0 %v738, %s743
        %v745 = vpop.permute.xlu0 %744
        %v746 = vlaneseq
        %v747 = vshrl.u32 %v746, 7
        %v748 = vsub.s32 6, %v747
        %v749 = vrot.slane %v570, %v748
        %751 = vbcast.lane.b32.xlu0 %v749, 256
        %v752 = vpop.permute.xlu0 %751
        %s754 = sor.u32 256, 8
        %755 = vbcast.lane.b32.xlu0 %v749, %s754
        %v756 = vpop.permute.xlu0 %755
        %v757 = vlaneseq
        %v758 = vshrl.u32 %v757, 7
        %v759 = vsub.s32 7, %v758
        %v760 = vrot.slane %v570, %v759
        %762 = vbcast.lane.b32.xlu0 %v760, 256
        %v763 = vpop.permute.xlu0 %762
        %s765 = sor.u32 256, 8
        %766 = vbcast.lane.b32.xlu0 %v760, %s765
        %v767 = vpop.permute.xlu0 %766
        %v768 = vld [vmem:[%s6 + $0x1] sm:$0x1]
        %v769 = vlaneseq
        %v770 = vshrl.u32 %v769, 7
        %v771 = vsub.s32 0, %v770
        %v772 = vrot.slane %v768, %v771
        %v773 = vmul.f32 %v686, %v772
        %v774 = vmul.f32 %v690, %v772
        %v775 = vmul.f32 %v697, %v772
        %v776 = vmul.f32 %v701, %v772
        %v777 = vmul.f32 %v708, %v772
        %v778 = vmul.f32 %v712, %v772
        %v779 = vmul.f32 %v719, %v772
        %v780 = vmul.f32 %v723, %v772
        %v781 = vmul.f32 %v730, %v772
        %v782 = vmul.f32 %v734, %v772
        %v783 = vmul.f32 %v741, %v772
        %v784 = vmul.f32 %v745, %v772
        %v785 = vmul.f32 %v752, %v772
        %v786 = vmul.f32 %v756, %v772
        %v787 = vmul.f32 %v763, %v772
        %v788 = vmul.f32 %v767, %v772
        %v789 = vadd.f32 %v664, %v773
        %v790 = vadd.f32 %v665, %v774
        %v791 = vadd.f32 %v666, %v775
        %v792 = vadd.f32 %v667, %v776
        %v793 = vadd.f32 %v668, %v777
        %v794 = vadd.f32 %v669, %v778
        %v795 = vadd.f32 %v670, %v779
        %v796 = vadd.f32 %v671, %v780
        %v797 = vadd.f32 %v672, %v781
        %v798 = vadd.f32 %v673, %v782
        %v799 = vadd.f32 %v674, %v783
        %v800 = vadd.f32 %v675, %v784
        %v801 = vadd.f32 %v676, %v785
        %v802 = vadd.f32 %v677, %v786
        %v803 = vadd.f32 %v678, %v787
        %v804 = vadd.f32 %v679, %v788
        %v805 = vld [vmem:[%s7] sm:$0x1]
        %v807 = vlaneseq
        %v808 = vshrl.u32 %v807, 7
        %v809 = vsub.s32 0, %v808
        %v810 = vrot.slane %v805, %v809
        %v812 = vadd.f32 %v789, %v810
        %v813 = vadd.f32 %v790, %v810
        %v814 = vadd.f32 %v791, %v810
        %v815 = vadd.f32 %v792, %v810
        %v816 = vadd.f32 %v793, %v810
        %v817 = vadd.f32 %v794, %v810
        %v818 = vadd.f32 %v795, %v810
        %v819 = vadd.f32 %v796, %v810
        %v820 = vadd.f32 %v797, %v810
        %v821 = vadd.f32 %v798, %v810
        %v822 = vadd.f32 %v799, %v810
        %v823 = vadd.f32 %v800, %v810
        %v824 = vadd.f32 %v801, %v810
        %v825 = vadd.f32 %v802, %v810
        %v826 = vadd.f32 %v803, %v810
        %v827 = vadd.f32 %v804, %v810
        %v828 = vmax.f32 %v812, 0.0
        %v829 = vmax.f32 %v813, 0.0
        %v830 = vmax.f32 %v814, 0.0
        %v831 = vmax.f32 %v815, 0.0
        %v832 = vmax.f32 %v816, 0.0
        %v833 = vmax.f32 %v817, 0.0
        %v834 = vmax.f32 %v818, 0.0
        %v835 = vmax.f32 %v819, 0.0
        %v836 = vmax.f32 %v820, 0.0
        %v837 = vmax.f32 %v821, 0.0
        %v838 = vmax.f32 %v822, 0.0
        %v839 = vmax.f32 %v823, 0.0
        %v840 = vmax.f32 %v824, 0.0
        %v841 = vmax.f32 %v825, 0.0
        %v842 = vmax.f32 %v826, 0.0
        %v843 = vmax.f32 %v827, 0.0
        %v844 = vld [vmem:[%s8] sm:$0x1]
        %v845 = vlaneseq
        %v846 = vshrl.u32 %v845, 7
        %v847 = vsub.s32 0, %v846
        %v848 = vrot.slane %v844, %v847
        %v849 = vmul.f32 %v828, %v848
        %v850 = vmul.f32 %v829, %v848
        %v851 = vmul.f32 %v830, %v848
        %v852 = vmul.f32 %v831, %v848
        %v853 = vmul.f32 %v832, %v848
        %v854 = vmul.f32 %v833, %v848
        %v855 = vmul.f32 %v834, %v848
        %v856 = vmul.f32 %v835, %v848
        %v857 = vmul.f32 %v836, %v848
        %v858 = vmul.f32 %v837, %v848
        %v859 = vmul.f32 %v838, %v848
        %v860 = vmul.f32 %v839, %v848
        %v861 = vmul.f32 %v840, %v848
        %v862 = vmul.f32 %v841, %v848
        %v863 = vmul.f32 %v842, %v848
        %v864 = vmul.f32 %v843, %v848
        %865 = vadd.xlane.f32.xlu0 %v849
        %v866 = vpop.xlane.xlu0 %865
        %867 = vadd.xlane.f32.xlu0 %v850
        %v868 = vpop.xlane.xlu0 %867
        %869 = vadd.xlane.f32.xlu0 %v851
        %v870 = vpop.xlane.xlu0 %869
        %871 = vadd.xlane.f32.xlu0 %v852
        %v872 = vpop.xlane.xlu0 %871
        %873 = vadd.xlane.f32.xlu0 %v853
        %v874 = vpop.xlane.xlu0 %873
        %875 = vadd.xlane.f32.xlu0 %v854
        %v876 = vpop.xlane.xlu0 %875
        %877 = vadd.xlane.f32.xlu0 %v855
        %v878 = vpop.xlane.xlu0 %877
        %879 = vadd.xlane.f32.xlu0 %v856
        %v880 = vpop.xlane.xlu0 %879
        %881 = vadd.xlane.f32.xlu0 %v857
        %v882 = vpop.xlane.xlu0 %881
        %883 = vadd.xlane.f32.xlu0 %v858
        %v884 = vpop.xlane.xlu0 %883
        %885 = vadd.xlane.f32.xlu0 %v859
        %v886 = vpop.xlane.xlu0 %885
        %887 = vadd.xlane.f32.xlu0 %v860
        %v888 = vpop.xlane.xlu0 %887
        %889 = vadd.xlane.f32.xlu0 %v861
        %v890 = vpop.xlane.xlu0 %889
        %891 = vadd.xlane.f32.xlu0 %v862
        %v892 = vpop.xlane.xlu0 %891
        %893 = vadd.xlane.f32.xlu0 %v863
        %v894 = vpop.xlane.xlu0 %893
        %895 = vadd.xlane.f32.xlu0 %v864
        %v896 = vpop.xlane.xlu0 %895
        %v897 = vld [vmem:[%s8 + $0x1] sm:$0x1]
        %v898 = vlaneseq
        %v899 = vshrl.u32 %v898, 7
        %v900 = vsub.s32 0, %v899
        %v901 = vrot.slane %v897, %v900
        %v902 = vmul.f32 %v828, %v901
        %v903 = vmul.f32 %v829, %v901
        %v904 = vmul.f32 %v830, %v901
        %v905 = vmul.f32 %v831, %v901
        %v906 = vmul.f32 %v832, %v901
        %v907 = vmul.f32 %v833, %v901
        %v908 = vmul.f32 %v834, %v901
        %v909 = vmul.f32 %v835, %v901
        %v910 = vmul.f32 %v836, %v901
        %v911 = vmul.f32 %v837, %v901
        %v912 = vmul.f32 %v838, %v901
        %v913 = vmul.f32 %v839, %v901
        %v914 = vmul.f32 %v840, %v901
        %v915 = vmul.f32 %v841, %v901
        %v916 = vmul.f32 %v842, %v901
        %v917 = vmul.f32 %v843, %v901
        %918 = vadd.xlane.f32.xlu0 %v902
        %v919 = vpop.xlane.xlu0 %918
        %920 = vadd.xlane.f32.xlu0 %v903
        %v921 = vpop.xlane.xlu0 %920
        %922 = vadd.xlane.f32.xlu0 %v904
        %v923 = vpop.xlane.xlu0 %922
        %924 = vadd.xlane.f32.xlu0 %v905
        %v925 = vpop.xlane.xlu0 %924
        %926 = vadd.xlane.f32.xlu0 %v906
        %v927 = vpop.xlane.xlu0 %926
        %928 = vadd.xlane.f32.xlu0 %v907
        %v929 = vpop.xlane.xlu0 %928
        %930 = vadd.xlane.f32.xlu0 %v908
        %v931 = vpop.xlane.xlu0 %930
        %932 = vadd.xlane.f32.xlu0 %v909
        %v933 = vpop.xlane.xlu0 %932
        %934 = vadd.xlane.f32.xlu0 %v910
        %v935 = vpop.xlane.xlu0 %934
        %936 = vadd.xlane.f32.xlu0 %v911
        %v937 = vpop.xlane.xlu0 %936
        %938 = vadd.xlane.f32.xlu0 %v912
        %v939 = vpop.xlane.xlu0 %938
        %940 = vadd.xlane.f32.xlu0 %v913
        %v941 = vpop.xlane.xlu0 %940
        %942 = vadd.xlane.f32.xlu0 %v914
        %v943 = vpop.xlane.xlu0 %942
        %944 = vadd.xlane.f32.xlu0 %v915
        %v945 = vpop.xlane.xlu0 %944
        %946 = vadd.xlane.f32.xlu0 %v916
        %v947 = vpop.xlane.xlu0 %946
        %948 = vadd.xlane.f32.xlu0 %v917
        %v949 = vpop.xlane.xlu0 %948
        %v950 = vld [vmem:[%s459 + $0x3] sm:$0x1]
        %v951 = vlaneseq
        %v952 = vshrl.u32 %v951, 7
        %v953 = vsub.s32 0, %v952
        %v954 = vrot.slane %v950, %v953
        %v971 = vlaneseq
        %v972 = vshrl.u32 %v971, 7
        %v973 = vsub.s32 %v499, %v972
        %v974 = vrot.slane %v866, %v973
        %v975 = vadd.s32 %v499, 4294967288
        %v976 = vlaneseq
        %v977 = vshrl.u32 %v976, 7
        %v978 = vsub.s32 %v975, %v977
        %v979 = vrot.slane %v868, %v978
        %vm980 = vcmask 130112
        %v981 = vsel %vm980, %v979, %v974
        %v982 = vlaneseq
        %v983 = vshrl.u32 %v982, 7
        %v984 = vsub.s32 %v499, %v983
        %v985 = vrot.slane %v870, %v984
        %v986 = vlaneseq
        %v987 = vshrl.u32 %v986, 7
        %v988 = vsub.s32 %v975, %v987
        %v989 = vrot.slane %v872, %v988
        %v990 = vsel %vm980, %v989, %v985
        %v991 = vlaneseq
        %v992 = vshrl.u32 %v991, 7
        %v993 = vsub.s32 %v499, %v992
        %v994 = vrot.slane %v874, %v993
        %v995 = vlaneseq
        %v996 = vshrl.u32 %v995, 7
        %v997 = vsub.s32 %v975, %v996
        %v998 = vrot.slane %v876, %v997
        %v999 = vsel %vm980, %v998, %v994
        %v1000 = vlaneseq
        %v1001 = vshrl.u32 %v1000, 7
        %v1002 = vsub.s32 %v499, %v1001
        %v1003 = vrot.slane %v878, %v1002
        %v1004 = vlaneseq
        %v1005 = vshrl.u32 %v1004, 7
        %v1006 = vsub.s32 %v975, %v1005
        %v1007 = vrot.slane %v880, %v1006
        %v1008 = vsel %vm980, %v1007, %v1003
        %v1009 = vlaneseq
        %v1010 = vshrl.u32 %v1009, 7
        %v1011 = vsub.s32 %v499, %v1010
        %v1012 = vrot.slane %v882, %v1011
        %v1013 = vlaneseq
        %v1014 = vshrl.u32 %v1013, 7
        %v1015 = vsub.s32 %v975, %v1014
        %v1016 = vrot.slane %v884, %v1015
        %v1017 = vsel %vm980, %v1016, %v1012
        %v1018 = vlaneseq
        %v1019 = vshrl.u32 %v1018, 7
        %v1020 = vsub.s32 %v499, %v1019
        %v1021 = vrot.slane %v886, %v1020
        %v1022 = vlaneseq
        %v1023 = vshrl.u32 %v1022, 7
        %v1024 = vsub.s32 %v975, %v1023
        %v1025 = vrot.slane %v888, %v1024
        %v1026 = vsel %vm980, %v1025, %v1021
        %v1027 = vlaneseq
        %v1028 = vshrl.u32 %v1027, 7
        %v1029 = vsub.s32 %v499, %v1028
        %v1030 = vrot.slane %v890, %v1029
        %v1031 = vlaneseq
        %v1032 = vshrl.u32 %v1031, 7
        %v1033 = vsub.s32 %v975, %v1032
        %v1034 = vrot.slane %v892, %v1033
        %v1035 = vsel %vm980, %v1034, %v1030
        %v1036 = vlaneseq
        %v1037 = vshrl.u32 %v1036, 7
        %v1038 = vsub.s32 %v499, %v1037
        %v1039 = vrot.slane %v894, %v1038
        %v1040 = vlaneseq
        %v1041 = vshrl.u32 %v1040, 7
        %v1042 = vsub.s32 %v975, %v1041
        %v1043 = vrot.slane %v896, %v1042
        %v1044 = vsel %vm980, %v1043, %v1039
        %vm1045 = vcmask 1041409
        %v1046 = vsel %vm1045, %v990, %v981
        %vm1047 = vcmask 1042434
        %v1048 = vsel %vm1047, %v999, %v1046
        %vm1049 = vcmask 1043459
        %v1050 = vsel %vm1049, %v1008, %v1048
        %vm1051 = vcmask 1044484
        %v1052 = vsel %vm1051, %v1017, %v1050
        %vm1053 = vcmask 1045509
        %v1054 = vsel %vm1053, %v1026, %v1052
        %vm1055 = vcmask 1046534
        %v1056 = vsel %vm1055, %v1035, %v1054
        %vm1057 = vcmask 1047559
        %v1058 = vsel %vm1057, %v1044, %v1056
        %v1060 = vadd.f32 %v954, %v1058
        %s1061 = sld [smem:[#allocation5 + $0x2]]
        %v1062 = vstv %s1061
        %v1063 = vadd.f32 %v1060, %v1062
        %v1064 = vld [vmem:[%s459 + $0x4] sm:$0x1]
        %v1065 = vlaneseq
        %v1066 = vshrl.u32 %v1065, 7
        %v1067 = vsub.s32 0, %v1066
        %v1068 = vrot.slane %v1064, %v1067
        %v1085 = vlaneseq
        %v1086 = vshrl.u32 %v1085, 7
        %v1087 = vsub.s32 %v499, %v1086
        %v1088 = vrot.slane %v919, %v1087
        %v1089 = vlaneseq
        %v1090 = vshrl.u32 %v1089, 7
        %v1091 = vsub.s32 %v975, %v1090
        %v1092 = vrot.slane %v921, %v1091
        %v1093 = vsel %vm980, %v1092, %v1088
        %v1094 = vlaneseq
        %v1095 = vshrl.u32 %v1094, 7
        %v1096 = vsub.s32 %v499, %v1095
        %v1097 = vrot.slane %v923, %v1096
        %v1098 = vlaneseq
        %v1099 = vshrl.u32 %v1098, 7
        %v1100 = vsub.s32 %v975, %v1099
        %v1101 = vrot.slane %v925, %v1100
        %v1102 = vsel %vm980, %v1101, %v1097
        %v1103 = vlaneseq
        %v1104 = vshrl.u32 %v1103, 7
        %v1105 = vsub.s32 %v499, %v1104
        %v1106 = vrot.slane %v927, %v1105
        %v1107 = vlaneseq
        %v1108 = vshrl.u32 %v1107, 7
        %v1109 = vsub.s32 %v975, %v1108
        %v1110 = vrot.slane %v929, %v1109
        %v1111 = vsel %vm980, %v1110, %v1106
        %v1112 = vlaneseq
        %v1113 = vshrl.u32 %v1112, 7
        %v1114 = vsub.s32 %v499, %v1113
        %v1115 = vrot.slane %v931, %v1114
        %v1116 = vlaneseq
        %v1117 = vshrl.u32 %v1116, 7
        %v1118 = vsub.s32 %v975, %v1117
        %v1119 = vrot.slane %v933, %v1118
        %v1120 = vsel %vm980, %v1119, %v1115
        %v1121 = vlaneseq
        %v1122 = vshrl.u32 %v1121, 7
        %v1123 = vsub.s32 %v499, %v1122
        %v1124 = vrot.slane %v935, %v1123
        %v1125 = vlaneseq
        %v1126 = vshrl.u32 %v1125, 7
        %v1127 = vsub.s32 %v975, %v1126
        %v1128 = vrot.slane %v937, %v1127
        %v1129 = vsel %vm980, %v1128, %v1124
        %v1130 = vlaneseq
        %v1131 = vshrl.u32 %v1130, 7
        %v1132 = vsub.s32 %v499, %v1131
        %v1133 = vrot.slane %v939, %v1132
        %v1134 = vlaneseq
        %v1135 = vshrl.u32 %v1134, 7
        %v1136 = vsub.s32 %v975, %v1135
        %v1137 = vrot.slane %v941, %v1136
        %v1138 = vsel %vm980, %v1137, %v1133
        %v1139 = vlaneseq
        %v1140 = vshrl.u32 %v1139, 7
        %v1141 = vsub.s32 %v499, %v1140
        %v1142 = vrot.slane %v943, %v1141
        %v1143 = vlaneseq
        %v1144 = vshrl.u32 %v1143, 7
        %v1145 = vsub.s32 %v975, %v1144
        %v1146 = vrot.slane %v945, %v1145
        %v1147 = vsel %vm980, %v1146, %v1142
        %v1148 = vlaneseq
        %v1149 = vshrl.u32 %v1148, 7
        %v1150 = vsub.s32 %v499, %v1149
        %v1151 = vrot.slane %v947, %v1150
        %v1152 = vlaneseq
        %v1153 = vshrl.u32 %v1152, 7
        %v1154 = vsub.s32 %v975, %v1153
        %v1155 = vrot.slane %v949, %v1154
        %v1156 = vsel %vm980, %v1155, %v1151
        %v1157 = vsel %vm1045, %v1102, %v1093
        %v1158 = vsel %vm1047, %v1111, %v1157
        %v1159 = vsel %vm1049, %v1120, %v1158
        %v1160 = vsel %vm1051, %v1129, %v1159
        %v1161 = vsel %vm1053, %v1138, %v1160
        %v1162 = vsel %vm1055, %v1147, %v1161
        %v1163 = vsel %vm1057, %v1156, %v1162
        %v1165 = vadd.f32 %v1068, %v1163
        %s1166 = sld [smem:[#allocation5 + $0x3]]
        %v1167 = vstv %s1166
        %v1168 = vadd.f32 %v1165, %v1167
        %v1169 = vmul.f32 %v1063, 0.01
        %v1170 = vmax.f32 %v1063, %v1169
        %v1171 = vmul.f32 %v1168, 0.01
        %v1172 = vmax.f32 %v1168, %v1171
        %v1173 = vlaneseq
        %v1174 = vshrl.u32 %v1173, 7
        %v1175 = vsub.s32 0, %v1174
        %v1176 = vrot.slane %v1170, %v1175
        %1178 = vbcast.lane.b32.xlu0 %v1176, 256
        %v1179 = vpop.permute.xlu0 %1178
        %s1181 = sor.u32 256, 8
        %1182 = vbcast.lane.b32.xlu0 %v1176, %s1181
        %v1183 = vpop.permute.xlu0 %1182
        %v1184 = vlaneseq
        %v1185 = vshrl.u32 %v1184, 7
        %v1186 = vsub.s32 1, %v1185
        %v1187 = vrot.slane %v1170, %v1186
        %1189 = vbcast.lane.b32.xlu0 %v1187, 256
        %v1190 = vpop.permute.xlu0 %1189
        %s1192 = sor.u32 256, 8
        %1193 = vbcast.lane.b32.xlu0 %v1187, %s1192
        %v1194 = vpop.permute.xlu0 %1193
        %v1195 = vlaneseq
        %v1196 = vshrl.u32 %v1195, 7
        %v1197 = vsub.s32 2, %v1196
        %v1198 = vrot.slane %v1170, %v1197
        %1200 = vbcast.lane.b32.xlu0 %v1198, 256
        %v1201 = vpop.permute.xlu0 %1200
        %s1203 = sor.u32 256, 8
        %1204 = vbcast.lane.b32.xlu0 %v1198, %s1203
        %v1205 = vpop.permute.xlu0 %1204
        %v1206 = vlaneseq
        %v1207 = vshrl.u32 %v1206, 7
        %v1208 = vsub.s32 3, %v1207
        %v1209 = vrot.slane %v1170, %v1208
        %1211 = vbcast.lane.b32.xlu0 %v1209, 256
        %v1212 = vpop.permute.xlu0 %1211
        %s1214 = sor.u32 256, 8
        %1215 = vbcast.lane.b32.xlu0 %v1209, %s1214
        %v1216 = vpop.permute.xlu0 %1215
        %v1217 = vlaneseq
        %v1218 = vshrl.u32 %v1217, 7
        %v1219 = vsub.s32 4, %v1218
        %v1220 = vrot.slane %v1170, %v1219
        %1222 = vbcast.lane.b32.xlu0 %v1220, 256
        %v1223 = vpop.permute.xlu0 %1222
        %s1225 = sor.u32 256, 8
        %1226 = vbcast.lane.b32.xlu0 %v1220, %s1225
        %v1227 = vpop.permute.xlu0 %1226
        %v1228 = vlaneseq
        %v1229 = vshrl.u32 %v1228, 7
        %v1230 = vsub.s32 5, %v1229
        %v1231 = vrot.slane %v1170, %v1230
        %1233 = vbcast.lane.b32.xlu0 %v1231, 256
        %v1234 = vpop.permute.xlu0 %1233
        %s1236 = sor.u32 256, 8
        %1237 = vbcast.lane.b32.xlu0 %v1231, %s1236
        %v1238 = vpop.permute.xlu0 %1237
        %v1239 = vlaneseq
        %v1240 = vshrl.u32 %v1239, 7
        %v1241 = vsub.s32 6, %v1240
        %v1242 = vrot.slane %v1170, %v1241
        %1244 = vbcast.lane.b32.xlu0 %v1242, 256
        %v1245 = vpop.permute.xlu0 %1244
        %s1247 = sor.u32 256, 8
        %1248 = vbcast.lane.b32.xlu0 %v1242, %s1247
        %v1249 = vpop.permute.xlu0 %1248
        %v1250 = vlaneseq
        %v1251 = vshrl.u32 %v1250, 7
        %v1252 = vsub.s32 7, %v1251
        %v1253 = vrot.slane %v1170, %v1252
        %1255 = vbcast.lane.b32.xlu0 %v1253, 256
        %v1256 = vpop.permute.xlu0 %1255
        %s1258 = sor.u32 256, 8
        %1259 = vbcast.lane.b32.xlu0 %v1253, %s1258
        %v1260 = vpop.permute.xlu0 %1259
        %v1261 = vld [vmem:[%s9] sm:$0x1]
        %v1262 = vlaneseq
        %v1263 = vshrl.u32 %v1262, 7
        %v1264 = vsub.s32 0, %v1263
        %v1265 = vrot.slane %v1261, %v1264
        %v1266 = vmul.f32 %v1179, %v1265
        %v1267 = vmul.f32 %v1183, %v1265
        %v1268 = vmul.f32 %v1190, %v1265
        %v1269 = vmul.f32 %v1194, %v1265
        %v1270 = vmul.f32 %v1201, %v1265
        %v1271 = vmul.f32 %v1205, %v1265
        %v1272 = vmul.f32 %v1212, %v1265
        %v1273 = vmul.f32 %v1216, %v1265
        %v1274 = vmul.f32 %v1223, %v1265
        %v1275 = vmul.f32 %v1227, %v1265
        %v1276 = vmul.f32 %v1234, %v1265
        %v1277 = vmul.f32 %v1238, %v1265
        %v1278 = vmul.f32 %v1245, %v1265
        %v1279 = vmul.f32 %v1249, %v1265
        %v1280 = vmul.f32 %v1256, %v1265
        %v1281 = vmul.f32 %v1260, %v1265
        %v1282 = vlaneseq
        %v1283 = vshrl.u32 %v1282, 7
        %v1284 = vsub.s32 0, %v1283
        %v1285 = vrot.slane %v1172, %v1284
        %1287 = vbcast.lane.b32.xlu0 %v1285, 256
        %v1288 = vpop.permute.xlu0 %1287
        %s1290 = sor.u32 256, 8
        %1291 = vbcast.lane.b32.xlu0 %v1285, %s1290
        %v1292 = vpop.permute.xlu0 %1291
        %v1293 = vlaneseq
        %v1294 = vshrl.u32 %v1293, 7
        %v1295 = vsub.s32 1, %v1294
        %v1296 = vrot.slane %v1172, %v1295
        %1298 = vbcast.lane.b32.xlu0 %v1296, 256
        %v1299 = vpop.permute.xlu0 %1298
        %s1301 = sor.u32 256, 8
        %1302 = vbcast.lane.b32.xlu0 %v1296, %s1301
        %v1303 = vpop.permute.xlu0 %1302
        %v1304 = vlaneseq
        %v1305 = vshrl.u32 %v1304, 7
        %v1306 = vsub.s32 2, %v1305
        %v1307 = vrot.slane %v1172, %v1306
        %1309 = vbcast.lane.b32.xlu0 %v1307, 256
        %v1310 = vpop.permute.xlu0 %1309
        %s1312 = sor.u32 256, 8
        %1313 = vbcast.lane.b32.xlu0 %v1307, %s1312
        %v1314 = vpop.permute.xlu0 %1313
        %v1315 = vlaneseq
        %v1316 = vshrl.u32 %v1315, 7
        %v1317 = vsub.s32 3, %v1316
        %v1318 = vrot.slane %v1172, %v1317
        %1320 = vbcast.lane.b32.xlu0 %v1318, 256
        %v1321 = vpop.permute.xlu0 %1320
        %s1323 = sor.u32 256, 8
        %1324 = vbcast.lane.b32.xlu0 %v1318, %s1323
        %v1325 = vpop.permute.xlu0 %1324
        %v1326 = vlaneseq
        %v1327 = vshrl.u32 %v1326, 7
        %v1328 = vsub.s32 4, %v1327
        %v1329 = vrot.slane %v1172, %v1328
        %1331 = vbcast.lane.b32.xlu0 %v1329, 256
        %v1332 = vpop.permute.xlu0 %1331
        %s1334 = sor.u32 256, 8
        %1335 = vbcast.lane.b32.xlu0 %v1329, %s1334
        %v1336 = vpop.permute.xlu0 %1335
        %v1337 = vlaneseq
        %v1338 = vshrl.u32 %v1337, 7
        %v1339 = vsub.s32 5, %v1338
        %v1340 = vrot.slane %v1172, %v1339
        %1342 = vbcast.lane.b32.xlu0 %v1340, 256
        %v1343 = vpop.permute.xlu0 %1342
        %s1345 = sor.u32 256, 8
        %1346 = vbcast.lane.b32.xlu0 %v1340, %s1345
        %v1347 = vpop.permute.xlu0 %1346
        %v1348 = vlaneseq
        %v1349 = vshrl.u32 %v1348, 7
        %v1350 = vsub.s32 6, %v1349
        %v1351 = vrot.slane %v1172, %v1350
        %1353 = vbcast.lane.b32.xlu0 %v1351, 256
        %v1354 = vpop.permute.xlu0 %1353
        %s1356 = sor.u32 256, 8
        %1357 = vbcast.lane.b32.xlu0 %v1351, %s1356
        %v1358 = vpop.permute.xlu0 %1357
        %v1359 = vlaneseq
        %v1360 = vshrl.u32 %v1359, 7
        %v1361 = vsub.s32 7, %v1360
        %v1362 = vrot.slane %v1172, %v1361
        %1364 = vbcast.lane.b32.xlu0 %v1362, 256
        %v1365 = vpop.permute.xlu0 %1364
        %s1367 = sor.u32 256, 8
        %1368 = vbcast.lane.b32.xlu0 %v1362, %s1367
        %v1369 = vpop.permute.xlu0 %1368
        %v1370 = vld [vmem:[%s9 + $0x1] sm:$0x1]
        %v1371 = vlaneseq
        %v1372 = vshrl.u32 %v1371, 7
        %v1373 = vsub.s32 0, %v1372
        %v1374 = vrot.slane %v1370, %v1373
        %v1375 = vmul.f32 %v1288, %v1374
        %v1376 = vmul.f32 %v1292, %v1374
        %v1377 = vmul.f32 %v1299, %v1374
        %v1378 = vmul.f32 %v1303, %v1374
        %v1379 = vmul.f32 %v1310, %v1374
        %v1380 = vmul.f32 %v1314, %v1374
        %v1381 = vmul.f32 %v1321, %v1374
        %v1382 = vmul.f32 %v1325, %v1374
        %v1383 = vmul.f32 %v1332, %v1374
        %v1384 = vmul.f32 %v1336, %v1374
        %v1385 = vmul.f32 %v1343, %v1374
        %v1386 = vmul.f32 %v1347, %v1374
        %v1387 = vmul.f32 %v1354, %v1374
        %v1388 = vmul.f32 %v1358, %v1374
        %v1389 = vmul.f32 %v1365, %v1374
        %v1390 = vmul.f32 %v1369, %v1374
        %v1391 = vadd.f32 %v1266, %v1375
        %v1392 = vadd.f32 %v1267, %v1376
        %v1393 = vadd.f32 %v1268, %v1377
        %v1394 = vadd.f32 %v1269, %v1378
        %v1395 = vadd.f32 %v1270, %v1379
        %v1396 = vadd.f32 %v1271, %v1380
        %v1397 = vadd.f32 %v1272, %v1381
        %v1398 = vadd.f32 %v1273, %v1382
        %v1399 = vadd.f32 %v1274, %v1383
        %v1400 = vadd.f32 %v1275, %v1384
        %v1401 = vadd.f32 %v1276, %v1385
        %v1402 = vadd.f32 %v1277, %v1386
        %v1403 = vadd.f32 %v1278, %v1387
        %v1404 = vadd.f32 %v1279, %v1388
        %v1405 = vadd.f32 %v1280, %v1389
        %v1406 = vadd.f32 %v1281, %v1390
        %v1407 = vld [vmem:[%s10] sm:$0x1]
        %v1409 = vlaneseq
        %v1410 = vshrl.u32 %v1409, 7
        %v1411 = vsub.s32 0, %v1410
        %v1412 = vrot.slane %v1407, %v1411
        %v1414 = vadd.f32 %v1391, %v1412
        %v1415 = vadd.f32 %v1392, %v1412
        %v1416 = vadd.f32 %v1393, %v1412
        %v1417 = vadd.f32 %v1394, %v1412
        %v1418 = vadd.f32 %v1395, %v1412
        %v1419 = vadd.f32 %v1396, %v1412
        %v1420 = vadd.f32 %v1397, %v1412
        %v1421 = vadd.f32 %v1398, %v1412
        %v1422 = vadd.f32 %v1399, %v1412
        %v1423 = vadd.f32 %v1400, %v1412
        %v1424 = vadd.f32 %v1401, %v1412
        %v1425 = vadd.f32 %v1402, %v1412
        %v1426 = vadd.f32 %v1403, %v1412
        %v1427 = vadd.f32 %v1404, %v1412
        %v1428 = vadd.f32 %v1405, %v1412
        %v1429 = vadd.f32 %v1406, %v1412
        %v1430 = vmax.f32 %v1414, 0.0
        %v1431 = vmax.f32 %v1415, 0.0
        %v1432 = vmax.f32 %v1416, 0.0
        %v1433 = vmax.f32 %v1417, 0.0
        %v1434 = vmax.f32 %v1418, 0.0
        %v1435 = vmax.f32 %v1419, 0.0
        %v1436 = vmax.f32 %v1420, 0.0
        %v1437 = vmax.f32 %v1421, 0.0
        %v1438 = vmax.f32 %v1422, 0.0
        %v1439 = vmax.f32 %v1423, 0.0
        %v1440 = vmax.f32 %v1424, 0.0
        %v1441 = vmax.f32 %v1425, 0.0
        %v1442 = vmax.f32 %v1426, 0.0
        %v1443 = vmax.f32 %v1427, 0.0
        %v1444 = vmax.f32 %v1428, 0.0
        %v1445 = vmax.f32 %v1429, 0.0
        %v1446 = vld [vmem:[#allocation4] sm:$0xff]
        %1448 = vset.pattern.permute.xlu0 0
        %1449 = vperm.xlu0 %1448, %v518
        %v1450 = vpop.permute.xlu0 %1449
        %v1452 = vmul.f32 %v1450, %v1446
        %v1453 = vlaneseq
        %v1454 = vshrl.u32 %v1453, 7
        %v1455 = vsub.s32 0, %v1454
        %v1456 = vrot.slane %v527, %v1455
        %1458 = vbcast.lane.b32.xlu0 %v1456, 256
        %v1459 = vpop.permute.xlu0 %1458
        %s1461 = sor.u32 256, 8
        %1462 = vbcast.lane.b32.xlu0 %v1456, %s1461
        %v1463 = vpop.permute.xlu0 %1462
        %v1464 = vlaneseq
        %v1465 = vshrl.u32 %v1464, 7
        %v1466 = vsub.s32 1, %v1465
        %v1467 = vrot.slane %v527, %v1466
        %1469 = vbcast.lane.b32.xlu0 %v1467, 256
        %v1470 = vpop.permute.xlu0 %1469
        %s1472 = sor.u32 256, 8
        %1473 = vbcast.lane.b32.xlu0 %v1467, %s1472
        %v1474 = vpop.permute.xlu0 %1473
        %v1475 = vlaneseq
        %v1476 = vshrl.u32 %v1475, 7
        %v1477 = vsub.s32 2, %v1476
        %v1478 = vrot.slane %v527, %v1477
        %1480 = vbcast.lane.b32.xlu0 %v1478, 256
        %v1481 = vpop.permute.xlu0 %1480
        %s1483 = sor.u32 256, 8
        %1484 = vbcast.lane.b32.xlu0 %v1478, %s1483
        %v1485 = vpop.permute.xlu0 %1484
        %v1486 = vlaneseq
        %v1487 = vshrl.u32 %v1486, 7
        %v1488 = vsub.s32 3, %v1487
        %v1489 = vrot.slane %v527, %v1488
        %1491 = vbcast.lane.b32.xlu0 %v1489, 256
        %v1492 = vpop.permute.xlu0 %1491
        %s1494 = sor.u32 256, 8
        %1495 = vbcast.lane.b32.xlu0 %v1489, %s1494
        %v1496 = vpop.permute.xlu0 %1495
        %v1497 = vlaneseq
        %v1498 = vshrl.u32 %v1497, 7
        %v1499 = vsub.s32 4, %v1498
        %v1500 = vrot.slane %v527, %v1499
        %1502 = vbcast.lane.b32.xlu0 %v1500, 256
        %v1503 = vpop.permute.xlu0 %1502
        %s1505 = sor.u32 256, 8
        %1506 = vbcast.lane.b32.xlu0 %v1500, %s1505
        %v1507 = vpop.permute.xlu0 %1506
        %v1508 = vlaneseq
        %v1509 = vshrl.u32 %v1508, 7
        %v1510 = vsub.s32 5, %v1509
        %v1511 = vrot.slane %v527, %v1510
        %1513 = vbcast.lane.b32.xlu0 %v1511, 256
        %v1514 = vpop.permute.xlu0 %1513
        %s1516 = sor.u32 256, 8
        %1517 = vbcast.lane.b32.xlu0 %v1511, %s1516
        %v1518 = vpop.permute.xlu0 %1517
        %v1519 = vlaneseq
        %v1520 = vshrl.u32 %v1519, 7
        %v1521 = vsub.s32 6, %v1520
        %v1522 = vrot.slane %v527, %v1521
        %1524 = vbcast.lane.b32.xlu0 %v1522, 256
        %v1525 = vpop.permute.xlu0 %1524
        %s1527 = sor.u32 256, 8
        %1528 = vbcast.lane.b32.xlu0 %v1522, %s1527
        %v1529 = vpop.permute.xlu0 %1528
        %v1530 = vlaneseq
        %v1531 = vshrl.u32 %v1530, 7
        %v1532 = vsub.s32 7, %v1531
        %v1533 = vrot.slane %v527, %v1532
        %1535 = vbcast.lane.b32.xlu0 %v1533, 256
        %v1536 = vpop.permute.xlu0 %1535
        %s1538 = sor.u32 256, 8
        %1539 = vbcast.lane.b32.xlu0 %v1533, %s1538
        %v1540 = vpop.permute.xlu0 %1539
        %v1541 = vmul.f32 %v1459, %v1430
        %v1542 = vmul.f32 %v1463, %v1431
        %v1543 = vmul.f32 %v1470, %v1432
        %v1544 = vmul.f32 %v1474, %v1433
        %v1545 = vmul.f32 %v1481, %v1434
        %v1546 = vmul.f32 %v1485, %v1435
        %v1547 = vmul.f32 %v1492, %v1436
        %v1548 = vmul.f32 %v1496, %v1437
        %v1549 = vmul.f32 %v1503, %v1438
        %v1550 = vmul.f32 %v1507, %v1439
        %v1551 = vmul.f32 %v1514, %v1440
        %v1552 = vmul.f32 %v1518, %v1441
        %v1553 = vmul.f32 %v1525, %v1442
        %v1554 = vmul.f32 %v1529, %v1443
        %v1555 = vmul.f32 %v1536, %v1444
        %v1556 = vmul.f32 %v1540, %v1445
        %v1557 = vadd.f32 %v1541, %v1542
        %v1558 = vrot.slane %v1557, 4
        %v1559 = vadd.f32 %v1557, %v1558
        %v1560 = vrot.slane %v1559, 2
        %v1561 = vadd.f32 %v1559, %v1560
        %v1562 = vrot.slane %v1561, 1
        %v1563 = vadd.f32 %v1561, %v1562
        %v1564 = vadd.f32 %v1543, %v1544
        %v1565 = vrot.slane %v1564, 4
        %v1566 = vadd.f32 %v1564, %v1565
        %v1567 = vrot.slane %v1566, 2
        %v1568 = vadd.f32 %v1566, %v1567
        %v1569 = vrot.slane %v1568, 1
        %v1570 = vadd.f32 %v1568, %v1569
        %v1571 = vadd.f32 %v1545, %v1546
        %v1572 = vrot.slane %v1571, 4
        %v1573 = vadd.f32 %v1571, %v1572
        %v1574 = vrot.slane %v1573, 2
        %v1575 = vadd.f32 %v1573, %v1574
        %v1576 = vrot.slane %v1575, 1
        %v1577 = vadd.f32 %v1575, %v1576
        %v1578 = vadd.f32 %v1547, %v1548
        %v1579 = vrot.slane %v1578, 4
        %v1580 = vadd.f32 %v1578, %v1579
        %v1581 = vrot.slane %v1580, 2
        %v1582 = vadd.f32 %v1580, %v1581
        %v1583 = vrot.slane %v1582, 1
        %v1584 = vadd.f32 %v1582, %v1583
        %v1585 = vadd.f32 %v1549, %v1550
        %v1586 = vrot.slane %v1585, 4
        %v1587 = vadd.f32 %v1585, %v1586
        %v1588 = vrot.slane %v1587, 2
        %v1589 = vadd.f32 %v1587, %v1588
        %v1590 = vrot.slane %v1589, 1
        %v1591 = vadd.f32 %v1589, %v1590
        %v1592 = vadd.f32 %v1551, %v1552
        %v1593 = vrot.slane %v1592, 4
        %v1594 = vadd.f32 %v1592, %v1593
        %v1595 = vrot.slane %v1594, 2
        %v1596 = vadd.f32 %v1594, %v1595
        %v1597 = vrot.slane %v1596, 1
        %v1598 = vadd.f32 %v1596, %v1597
        %v1599 = vadd.f32 %v1553, %v1554
        %v1600 = vrot.slane %v1599, 4
        %v1601 = vadd.f32 %v1599, %v1600
        %v1602 = vrot.slane %v1601, 2
        %v1603 = vadd.f32 %v1601, %v1602
        %v1604 = vrot.slane %v1603, 1
        %v1605 = vadd.f32 %v1603, %v1604
        %v1606 = vadd.f32 %v1555, %v1556
        %v1607 = vrot.slane %v1606, 4
        %v1608 = vadd.f32 %v1606, %v1607
        %v1609 = vrot.slane %v1608, 2
        %v1610 = vadd.f32 %v1608, %v1609
        %v1611 = vrot.slane %v1610, 1
        %v1612 = vadd.f32 %v1610, %v1611
        %v1621 = vsel %vm1045, %v1570, %v1563
        %v1622 = vsel %vm1047, %v1577, %v1621
        %v1623 = vsel %vm1049, %v1584, %v1622
        %v1624 = vsel %vm1051, %v1591, %v1623
        %v1625 = vsel %vm1053, %v1598, %v1624
        %v1626 = vsel %vm1055, %v1605, %v1625
        %v1627 = vsel %vm1057, %v1612, %v1626
        %v1629 = vadd.f32 %v1452, %v1627
        %1630 = vst [vmem:[#allocation4] sm:$0xff] %v1629
        // Predicated region
        $region73: #{tpu_custom_call.1} parent=63 // pred_check
          %p1631 = pneg %p476
        $region74: #{tpu_custom_call.1} parent=63 // pred_check_branch
          %1633 = sbr.rel (%p1631) target = $region76
        $region75: #{tpu_custom_call.1} parent=63 // pred_region
          %v1634 = vld [vmem:[#allocation4] sm:$0xff]
          %v1635 = vld [vmem:[#allocation3] sm:$0xff]
          %v1636 = vrcp.pop %v1635
          %1638 = vset.pattern.permute.xlu0 0
          %1639 = vperm.xlu0 %1638, %v1636
          %v1640 = vpop.permute.xlu0 %1639
          %v1642 = vmul.f32 %v1634, %v1640
          %v1643 = vld [vmem:[%s475] sm:$0xff]
          %v1644 = vadd.f32 %v1642, %v1643
          %1645 = vst [vmem:[%s455] sm:$0xff] %v1644
        $region76: #{tpu_custom_call.1} parent=63 // pred_fallthru
          _
        %s1646 = sand.u32 %s302, 1
        %s1647 = scalar_lea.sflag [#allocation6], %s1646
        %s1648 = sand.u32 %s302, 1
        %s1649 = smul.addr %s1648, 8
        %s1650 = scalar_lea.vmem [#allocation8], %s1649
        // Predicated region
        $region77: #{tpu_custom_call.1} parent=63 // pred_check
          %p1651 = pneg %p312
        $region78: #{tpu_custom_call.1} parent=63 // pred_check_branch
          %1653 = sbr.rel (%p1651) target = $region80
        $region79: #{tpu_custom_call.1} parent=63 // pred_region
          %s1655 = ssub.s32 128, 128
          %1656 = vsyncadd %s1647, %s1655
          %s1657 = smul.addr %s30, 128
          %s1658 = scalar_lea.hbm %s11, %s1657
          %s1660 = sshll.u32 %s1650, 4
          %s1661 = int_to_ptr.vmem [resolvable:$true] %s1660
          %1663 = dma.vmem_to_hbm [thread:$0]  %s1661, 128, %s1658, %s1647
        $region80: #{tpu_custom_call.1} parent=63 // pred_fallthru
          _
      $region64: #{tpu_custom_call.1} parent=5 // pred_fallthru
        _
      %p1664 = scmp.le.s32.totalorder 2, %s21
      // Predicated region
      $region81: #{tpu_custom_call.1} parent=5 // pred_check
        %p1665 = pneg %p1664
      $region82: #{tpu_custom_call.1} parent=5 // pred_check_branch
        %1667 = sbr.rel (%p1665) target = $region84
      $region83: #{tpu_custom_call.1} parent=5 // pred_region
        %s1668 = ssub.s32 %s21, 2
        // Predicated region
        $region85: #{tpu_custom_call.1} parent=83 // pred_check
          %p1669 = pneg %p318
        $region86: #{tpu_custom_call.1} parent=83 // pred_check_branch
          %1671 = sbr.rel (%p1669) target = $region88
        $region87: #{tpu_custom_call.1} parent=83 // pred_region
          %s1672 = sand.u32 %s303, 1
          %s1673 = scalar_lea.sflag [#allocation6], %s1672
          %s1674 = sand.u32 %s303, 1
          %s1675 = smul.addr %s1674, 8
          %s1676 = scalar_lea.vmem [#allocation8], %s1675
          %1677 = dma.done %s1673, 128
        $region88: #{tpu_custom_call.1} parent=83 // pred_fallthru
          _
      $region84: #{tpu_custom_call.1} parent=5 // pred_fallthru
        _
    $region6: #{tpu_custom_call.1} parent=1 // loop_footer
      %s25 = sadd.s32 1, %s21
    $region7: #{tpu_custom_call.1} parent=1 // loop_footer_branch
      %20 = sbr.rel target = $region3
    $region8: #{tpu_custom_call.1} parent=1 // loop_exit
      _
    %1678 = vsyncpa [#allocation6], 1
    %s1679 = scalar_lea.sflag [#allocation6], 1
    %1680 = vsyncpa %s1679, 1
    %1681 = vsyncpa [#allocation7], 1
    %s1682 = scalar_lea.sflag [#allocation7], 1
    %1683 = vsyncpa %s1682, 1

</llo_original>
